<compile_context>
chip_gen: v5e
topology: v5e:2x2
jax: 0.10.0
libtpu: 0.0.40
codegen_flags: <defaults>
</compile_context>

<pallas_src>
import functools

import jax
import jax.numpy as jnp
from jax import lax
from jax.experimental import pallas as pl
from jax.experimental.pallas import tpu as pltpu

ATT_DIM = 312   # real attribute dim (nn.Linear(312, 512))
ATT_PAD = 384   # zero-padded contraction dim (3 * 128 lanes)
HID = 512
OUT = 512
_MB = 1024 * 1024


# ---------------------------------------------------------------- helpers ---
def _pick_batch_block(batchsz, n_way, target=8):
    """Largest legal batch block BB: divides batchsz and keeps the flattened att
    block (BB*n_way rows) sublane-aligned (multiple of 8) or full extent.
    Prefers a grid of >= 2 steps so both v7x TensorCores get work."""
    legal = [bb for bb in range(1, batchsz + 1)
             if batchsz % bb == 0 and (bb == batchsz or (bb * n_way) % 8 == 0)]
    multi = [bb for bb in legal if batchsz // bb >= 2]
    pool = multi if multi else legal
    capped = [bb for bb in pool if bb <= target]
    return max(capped) if capped else min(pool)


def _compiler_params(semantics, working_set_bytes):
    kwargs = dict(dimension_semantics=semantics)
    # Scoped-VMEM defaults (16 MiB v5e, 32 MiB v6e/v7x) are well below physical;
    # raise the limit only when the per-step working set grows (v7x headroom kept).
    if working_set_bytes > 12 * _MB:
        kwargs["vmem_limit_bytes"] = int(min(2 * working_set_bytes, 60 * _MB))
    return pltpu.CompilerParams(**kwargs)


# ---------------------------------------------------------------- kernels ---
def _mlp_loss_kernel(x_ref, att_ref, w1_ref, b1_ref, w2_ref, b2_ref, loss_ref,
                     *, tm, m_total, need_mask):
    # Train path, one TM-row tile per grid step:
    #   relu(relu(att@W1+b1)@W2+b2), partial sum of (x - out)^2 into a resident
    #   (1,1) accumulator output. Pure f32 to preserve the torch loss numerics.
    @pl.when(pl.program_id(0) == 0)
    def _init():
        loss_ref[...] = jnp.zeros_like(loss_ref)

    att = att_ref[...]                                           # (tm, ATT_PAD) f32
    h = jnp.maximum(
        jnp.dot(att, w1_ref[...], preferred_element_type=jnp.float32) + b1_ref[...], 0.0)
    o = jnp.maximum(
        jnp.dot(h, w2_ref[...], preferred_element_type=jnp.float32) + b2_ref[...], 0.0)
    d = x_ref[...] - o
    sq = d * d
    if need_mask:                                                # last partial tile
        row = pl.program_id(0) * tm + lax.broadcasted_iota(jnp.int32, (tm, 1), 0)
        sq = jnp.where(row < m_total, sq, 0.0)
    loss_ref[...] += jnp.sum(sq, keepdims=True)


def _eval_fused_kernel(x_ref, att_ref, xl_ref, al_ref,
                       w1_ref, b1_ref, w2_ref, b2_ref,
                       pred_ref, correct_ref):
    # Per grid step (a block of bb batches):
    #   x_ref   : (bb, setsz, OUT) f32      att_ref : (bb*n_way, ATT_PAD) f32
    #   xl_ref  : (bb, 1, setsz) int32      al_ref  : (bb, n_way, 1) int32
    #   weights : grid-invariant VMEM blocks (w bf16, b f32)
    #   pred_ref: (1, 1, bb*setsz) int32    correct_ref: (1, 1, 1) int32
    bb, setsz, _ = x_ref.shape
    n_way = al_ref.shape[1]

    # MLP on all bb*n_way attribute rows at once (bf16 operands, f32 accumulate).
    ab = att_ref[...].astype(jnp.bfloat16)
    h = jnp.maximum(
        jnp.dot(ab, w1_ref[...], preferred_element_type=jnp.float32) + b1_ref[...], 0.0)
    a = jnp.maximum(
        jnp.dot(h.astype(jnp.bfloat16), w2_ref[...],
                preferred_element_type=jnp.float32) + b2_ref[...], 0.0)  # (bb*n_way, OUT) f32

    a2_all = jnp.sum(a * a, axis=1, keepdims=True)               # (bb*n_way, 1) f32
    a_bf = a.astype(jnp.bfloat16)
    row = lax.broadcasted_iota(jnp.int32, (n_way, setsz), 0)

    preds = []
    corr = jnp.zeros((1, 1), jnp.int32)
    for i in range(bb):                                          # statically unrolled
        a_i = a_bf[i * n_way:(i + 1) * n_way, :]                 # (n_way, OUT) bf16
        a2 = a2_all[i * n_way:(i + 1) * n_way, :]                # (n_way, 1)
        xb = x_ref[i].astype(jnp.bfloat16)                       # (setsz, OUT) bf16
        # |x|^2 is argmin-invariant and dropped; score is computed transposed
        # (n_way, setsz) so |a|^2 stays a keepdims column (no XLU transpose).
        ax = lax.dot_general(a_i, xb, (((1,), (1,)), ((), ())),
                             preferred_element_type=jnp.float32)  # (n_way, setsz)
        score = a2 - 2.0 * ax
        # argmin over n_way (sublane axis), first index on ties (matches torch.min).
        min_s = jnp.min(score, axis=0, keepdims=True)             # (1, setsz)
        idx = jnp.min(jnp.where(score == min_s, row, n_way),
                      axis=0, keepdims=True)                      # (1, setsz) int32
        # Gather att_label[idx] via one-hot select, compare with x_label.
        lbl = al_ref[i]                                           # (n_way, 1) int32
        pred_i = jnp.sum(jnp.where(row == idx, lbl, 0),
                         axis=0, keepdims=True)                   # (1, setsz) int32
        corr = corr + jnp.sum((pred_i == xl_ref[i]).astype(jnp.int32),
                              axis=1, keepdims=True)              # (1, 1)
        preds.append(pred_i)

    pred_ref[0] = jnp.concatenate(preds, axis=1)                  # lane-dense (1, bb*setsz)
    correct_ref[0] = corr


# ---------------------------------------------------------------- wrapper ---
def zeroshot_forward(x, x_label, att, att_label, params, train=True):
    w1, b1, w2, b2 = params               # w1 zero-padded to (ATT_PAD, HID), all f32
    batchsz, setsz, c = x.shape
    n_way = att.shape[1]

    # Zero-pad attribute dim 312 -> 384 (matches the zero-padded rows of w1).
    att_p = jnp.pad(att, ((0, 0), (0, 0), (0, ATT_PAD - ATT_DIM)))

    if train:
        # torch: loss = ((x - net(att))^2).sum() / (batchsz * setsz)
        assert setsz == n_way and c == OUT, \
            "train path requires setsz == n_way and c == 512 (elementwise x - net(att))"
        m = batchsz * setsz
        tm = m if m <= 1024 else 1024
        grid_m = pl.cdiv(m, tm)
        x_flat = x.reshape(m, c)
        att_flat = att_p.reshape(m, ATT_PAD)
        kernel = functools.partial(_mlp_loss_kernel, tm=tm, m_total=m,
                                   need_mask=(m % tm != 0))
        ws = (2 * tm * (c + ATT_PAD) * 4
              + 2 * (ATT_PAD * HID + HID * OUT + HID + OUT) * 4
              + tm * (HID + OUT) * 4)
        loss = pl.pallas_call(
            kernel,
            grid=(grid_m,),
            in_specs=[
                pl.BlockSpec((tm, c), lambda i: (i, 0)),
                pl.BlockSpec((tm, ATT_PAD), lambda i: (i, 0)),
                pl.BlockSpec((ATT_PAD, HID), lambda i: (0, 0)),   # grid-resident weights
                pl.BlockSpec((1, HID), lambda i: (0, 0)),
                pl.BlockSpec((HID, OUT), lambda i: (0, 0)),
                pl.BlockSpec((1, OUT), lambda i: (0, 0)),
            ],
            out_specs=pl.BlockSpec((1, 1), lambda i: (0, 0)),      # resident accumulator
            out_shape=jax.ShapeDtypeStruct((1, 1), jnp.float32),
            compiler_params=_compiler_params(("arbitrary",), ws),
        )(x_flat, att_flat, w1, b1, w2, b2)
        return loss[0, 0] / (batchsz * setsz)

    # ---- eval path: one fused kernel, grid over blocks of bb batches ----------
    bb = _pick_batch_block(batchsz, n_way)
    nblk = batchsz // bb

    att2 = att_p.reshape(batchsz * n_way, ATT_PAD)                 # flat rows for the MLP
    xl3 = x_label.reshape(batchsz, 1, setsz).astype(jnp.int32)
    al3 = att_label.reshape(batchsz, n_way, 1).astype(jnp.int32)
    w1_bf = w1.astype(jnp.bfloat16)                                # bf16 MXU operands
    w2_bf = w2.astype(jnp.bfloat16)

    ws = (2 * bb * (setsz * c + n_way * ATT_PAD + 2 * setsz + n_way + 1) * 4
          + 2 * (ATT_PAD * HID + HID * OUT) * 2
          + 2 * (HID + OUT) * 4
          + bb * n_way * (HID + OUT) * 4)

    # TODO(synk): add pipeline_mode=pl.Buffered(1) on the grid-invariant weight
    # specs if single-buffering them is ever needed for VMEM headroom at large bb.
    pred3, correct_b = pl.pallas_call(
        _eval_fused_kernel,
        grid=(nblk,),
        in_specs=[
            pl.BlockSpec((bb, setsz, c), lambda b: (b, 0, 0)),
            pl.BlockSpec((bb * n_way, ATT_PAD), lambda b: (b, 0)),
            pl.BlockSpec((bb, 1, setsz), lambda b: (b, 0, 0)),
            pl.BlockSpec((bb, n_way, 1), lambda b: (b, 0, 0)),
            pl.BlockSpec((ATT_PAD, HID), lambda b: (0, 0)),        # resident weights
            pl.BlockSpec((1, HID), lambda b: (0, 0)),
            pl.BlockSpec((HID, OUT), lambda b: (0, 0)),
            pl.BlockSpec((1, OUT), lambda b: (0, 0)),
        ],
        out_specs=[
            pl.BlockSpec((1, 1, bb * setsz), lambda b: (b, 0, 0)),  # lane-dense pred slab
            pl.BlockSpec((1, 1, 1), lambda b: (b, 0, 0)),
        ],
        out_shape=(
            jax.ShapeDtypeStruct((nblk, 1, bb * setsz), jnp.int32),
            jax.ShapeDtypeStruct((nblk, 1, 1), jnp.int32),
        ),
        compiler_params=_compiler_params(("parallel",), ws),
    )(x, att2, xl3, al3, w1_bf, b1, w2_bf, b2)

    pred = pred3.reshape(batchsz, setsz)          # [B, setsz]
    correct = jnp.sum(correct_b)                  # scalar
    return pred, correct


# -------------------------------------------------------------------- init --
def init_params(key):
    """nn.Linear-style init (U(-k, k), k = 1/sqrt(fan_in)); w1 zero-padded to ATT_PAD rows."""
    k1 = 1.0 / jnp.sqrt(ATT_DIM)
    k2 = 1.0 / jnp.sqrt(HID)
    ks = jax.random.split(key, 4)
    w1_real = jax.random.uniform(ks[0], (ATT_DIM, HID), jnp.float32, -k1, k1)
    w1 = jnp.pad(w1_real, ((0, ATT_PAD - ATT_DIM), (0, 0)))   # padded rows are zero
    b1 = jax.random.uniform(ks[1], (1, HID), jnp.float32, -k1, k1)
    w2 = jax.random.uniform(ks[2], (HID, OUT), jnp.float32, -k2, k2)
    b2 = jax.random.uniform(ks[3], (1, OUT), jnp.float32, -k2, k2)
    return w1, b1, w2, b2


# -------------------------------------------------------------------- main --
if __name__ == "__main__":
    key = jax.random.PRNGKey(0)
    k_par, k_x, k_att, k_xl, k_al = jax.random.split(key, 5)

    batchsz, setsz, n_way, c = 2, 4, 4, 512   # train path requires setsz == n_way, c == 512
    params = init_params(k_par)

    x = jax.random.normal(k_x, (batchsz, setsz, c), jnp.float32)
    att = jax.random.normal(k_att, (batchsz, n_way, ATT_DIM), jnp.float32)
    x_label = jax.random.randint(k_xl, (batchsz, setsz), 0, n_way, jnp.int32)
    att_label = jax.random.randint(k_al, (batchsz, n_way), 0, n_way, jnp.int32)

    # training mode -> scalar loss
    loss = zeroshot_forward(x, x_label, att, att_label, params, train=True)
    jax.block_until_ready(loss)

    # eval mode -> (pred, correct)
    pred, correct = zeroshot_forward(x, x_label, att, att_label, params, train=False)
    jax.block_until_ready((pred, correct))

    print("KERNEL_OK")
</pallas_src>

<mosaic_0001>
module attributes {stable_mosaic.version = 11 : i64} {
  func.func @_mlp_loss_kernel(%arg0: i32, %arg1: memref<8x512xf32, #tpu.memory_space<vmem>>, %arg2: memref<8x384xf32, #tpu.memory_space<vmem>>, %arg3: memref<384x512xf32, #tpu.memory_space<vmem>>, %arg4: memref<1x512xf32, #tpu.memory_space<vmem>>, %arg5: memref<512x512xf32, #tpu.memory_space<vmem>>, %arg6: memref<1x512xf32, #tpu.memory_space<vmem>>, %arg7: memref<1x1xf32, #tpu.memory_space<vmem>>) attributes {dimension_semantics = [#tpu.dimension_semantics<arbitrary>], iteration_bounds = array<i64: 1>, scalar_prefetch = 0 : i64, scratch_operands = 0 : i64, tpu.core_type = #tpu.core_type<tc>, window_params = [{transform_indices = @transform_0, window_bounds = array<i64: 8, 512>}, {transform_indices = @transform_1, window_bounds = array<i64: 8, 384>}, {pipeline_mode = #tpu.pipeline_mode<synchronous>, transform_indices = @transform_2, window_bounds = array<i64: 384, 512>}, {pipeline_mode = #tpu.pipeline_mode<synchronous>, transform_indices = @transform_3, window_bounds = array<i64: 1, 512>}, {pipeline_mode = #tpu.pipeline_mode<synchronous>, transform_indices = @transform_4, window_bounds = array<i64: 512, 512>}, {pipeline_mode = #tpu.pipeline_mode<synchronous>, transform_indices = @transform_5, window_bounds = array<i64: 1, 512>}, {pipeline_mode = #tpu.pipeline_mode<synchronous>, transform_indices = @transform_6, window_bounds = array<i64: 1, 1>}]} {
    %c0_i32 = arith.constant 0 : i32
    %0 = arith.cmpi eq, %arg0, %c0_i32 : i32
    %1 = arith.extui %0 : i1 to i32
    %c0_i32_0 = arith.constant 0 : i32
    %2 = arith.cmpi ne, %1, %c0_i32_0 : i32
    scf.if %2 {
      %cst_20 = arith.constant 0.000000e+00 : f32
      %29 = vector.broadcast %cst_20 : f32 to vector<1x1xf32>
      %c0_21 = arith.constant 0 : index
      %c0_22 = arith.constant 0 : index
      %30 = vector.load %arg7[%c0_21, %c0_22] : memref<1x1xf32, #tpu.memory_space<vmem>>, vector<1x1xf32>
      tpu.vector_store %arg7[%c0_21, %c0_22], %29 {strides = array<i32>} : memref<1x1xf32, #tpu.memory_space<vmem>>, vector<1x1xf32>,
    } else {
    }
    %c0 = arith.constant 0 : index
    %c0_1 = arith.constant 0 : index
    %3 = vector.load %arg2[%c0, %c0_1] : memref<8x384xf32, #tpu.memory_space<vmem>>, vector<8x384xf32>
    %c0_2 = arith.constant 0 : index
    %c0_3 = arith.constant 0 : index
    %4 = vector.load %arg3[%c0_2, %c0_3] : memref<384x512xf32, #tpu.memory_space<vmem>>, vector<384x512xf32>
    %cst = arith.constant dense<0.000000e+00> : vector<8x512xf32>
    %5 = tpu.matmul %3, %4, %cst {dimension_numbers = #tpu.dot_dimension_numbers<[1], [0], [0], [1], [0, 0, 1, 1], [], []>} : vector<8x384xf32>, vector<384x512xf32>, vector<8x512xf32> -> vector<8x512xf32>
    %c0_4 = arith.constant 0 : index
    %c0_5 = arith.constant 0 : index
    %6 = vector.load %arg4[%c0_4, %c0_5] : memref<1x512xf32, #tpu.memory_space<vmem>>, vector<1x512xf32>
    %7 = vector.broadcast %6 : vector<1x512xf32> to vector<8x512xf32>
    %8 = arith.addf %5, %7 : vector<8x512xf32>
    %cst_6 = arith.constant 0.000000e+00 : f32
    %9 = vector.broadcast %cst_6 : f32 to vector<8x512xf32>
    %10 = arith.maximumf %8, %9 : vector<8x512xf32>
    %c0_7 = arith.constant 0 : index
    %c0_8 = arith.constant 0 : index
    %11 = vector.load %arg5[%c0_7, %c0_8] : memref<512x512xf32, #tpu.memory_space<vmem>>, vector<512x512xf32>
    %cst_9 = arith.constant dense<0.000000e+00> : vector<8x512xf32>
    %12 = tpu.matmul %10, %11, %cst_9 {dimension_numbers = #tpu.dot_dimension_numbers<[1], [0], [0], [1], [0, 0, 1, 1], [], []>} : vector<8x512xf32>, vector<512x512xf32>, vector<8x512xf32> -> vector<8x512xf32>
    %c0_10 = arith.constant 0 : index
    %c0_11 = arith.constant 0 : index
    %13 = vector.load %arg6[%c0_10, %c0_11] : memref<1x512xf32, #tpu.memory_space<vmem>>, vector<1x512xf32>
    %14 = vector.broadcast %13 : vector<1x512xf32> to vector<8x512xf32>
    %15 = arith.addf %12, %14 : vector<8x512xf32>
    %cst_12 = arith.constant 0.000000e+00 : f32
    %16 = vector.broadcast %cst_12 : f32 to vector<8x512xf32>
    %17 = arith.maximumf %15, %16 : vector<8x512xf32>
    %c0_13 = arith.constant 0 : index
    %c0_14 = arith.constant 0 : index
    %18 = vector.load %arg1[%c0_13, %c0_14] : memref<8x512xf32, #tpu.memory_space<vmem>>, vector<8x512xf32>
    %19 = arith.subf %18, %17 : vector<8x512xf32>
    %20 = arith.mulf %19, %19 : vector<8x512xf32>
    %c0_15 = arith.constant 0 : index
    %c0_16 = arith.constant 0 : index
    %21 = vector.load %arg7[%c0_15, %c0_16] : memref<1x1xf32, #tpu.memory_space<vmem>>, vector<1x1xf32>
    %22 = vector.shape_cast %20 : vector<8x512xf32> to vector<1x8x512xf32>
    %cst_17 = arith.constant dense<0.000000e+00> : vector<1xf32>
    %23 = vector.multi_reduction <add>, %22, %cst_17 [1, 2] : vector<1x8x512xf32> to vector<1xf32>
    %24 = vector.shape_cast %23 : vector<1xf32> to vector<1x1x1xf32>
    %25 = vector.extract %24[0, 0, 0] : f32 from vector<1x1x1xf32>
    %26 = vector.broadcast %25 : f32 to vector<1x1xf32>
    %27 = arith.addf %21, %26 : vector<1x1xf32>
    %c0_18 = arith.constant 0 : index
    %c0_19 = arith.constant 0 : index
    %28 = vector.load %arg7[%c0_18, %c0_19] : memref<1x1xf32, #tpu.memory_space<vmem>>, vector<1x1xf32>
    tpu.vector_store %arg7[%c0_18, %c0_19], %27 {strides = array<i32>} : memref<1x1xf32, #tpu.memory_space<vmem>>, vector<1x1xf32>,
    return
  }
  func.func @transform_0(%arg0: i32) -> (i32, i32) {
    %c0_i32 = arith.constant 0 : i32
    %c0_i32_0 = arith.constant 0 : i32
    return %arg0, %c0_i32 : i32, i32
  }
  func.func @transform_1(%arg0: i32) -> (i32, i32) {
    %c0_i32 = arith.constant 0 : i32
    %c0_i32_0 = arith.constant 0 : i32
    return %arg0, %c0_i32 : i32, i32
  }
  func.func @transform_2(%arg0: i32) -> (i32, i32) {
    %c0_i32 = arith.constant 0 : i32
    %c0_i32_0 = arith.constant 0 : i32
    %c0_i32_1 = arith.constant 0 : i32
    return %c0_i32, %c0_i32_0 : i32, i32
  }
  func.func @transform_3(%arg0: i32) -> (i32, i32) {
    %c0_i32 = arith.constant 0 : i32
    %c0_i32_0 = arith.constant 0 : i32
    %c0_i32_1 = arith.constant 0 : i32
    return %c0_i32, %c0_i32_0 : i32, i32
  }
  func.func @transform_4(%arg0: i32) -> (i32, i32) {
    %c0_i32 = arith.constant 0 : i32
    %c0_i32_0 = arith.constant 0 : i32
    %c0_i32_1 = arith.constant 0 : i32
    return %c0_i32, %c0_i32_0 : i32, i32
  }
  func.func @transform_5(%arg0: i32) -> (i32, i32) {
    %c0_i32 = arith.constant 0 : i32
    %c0_i32_0 = arith.constant 0 : i32
    %c0_i32_1 = arith.constant 0 : i32
    return %c0_i32, %c0_i32_0 : i32, i32
  }
  func.func @transform_6(%arg0: i32) -> (i32, i32) {
    %c0_i32 = arith.constant 0 : i32
    %c0_i32_0 = arith.constant 0 : i32
    %c0_i32_1 = arith.constant 0 : i32
    return %c0_i32, %c0_i32_0 : i32, i32
  }
}

</mosaic_0001>

<llo_original>
// kernel: tpu_custom_call.1
$region0: #{tpu_custom_call.1}
  #allocation0 [shape = 'u32[]', space=smem, size = 0x4, offset = 0x4, fixed_abs, tag = 'smem constant byte address 0x4 - core index']
  #allocation1 [shape = 'u32[72,128]{1,0:T(1,128)}', space=vmem, size = 0x9000, scoped, tag = 'internal scratch']
  %s0 = inlined_call_operand.hbm [shape: f32[8,512], index: 0, kind: input, shape index: {}]
  %s1 = inlined_call_operand.hbm [shape: f32[8,384], index: 1, kind: input, shape index: {}]
  %s2 = inlined_call_operand.hbm [shape: f32[384,512], index: 2, kind: input, shape index: {}]
  %s3 = inlined_call_operand.hbm [shape: f32[1,512], index: 3, kind: input, shape index: {}]
  %s4 = inlined_call_operand.hbm [shape: f32[512,512], index: 4, kind: input, shape index: {}]
  %s5 = inlined_call_operand.vmem [shape: f32[1,512], index: 5, kind: input, shape index: {}]
  %s6 = inlined_call_operand.hbm [shape: f32[1,1], index: 6, kind: output, shape index: {}]
  %s7 = sld [smem:[#allocation0]]
  $region58: #{tpu_custom_call.1} parent=0
    _
  %s9 = ssub.s32 1, %s7
  %s10 = scalar_select 0, %s9, %s7
  $region1: #{tpu_custom_call.1} parent=0
    #allocation2 [shape = 'u8[16384]{0}', space=vmem, size = 0x4000, scoped, tag = 'input window, operand 0, single buffered']
    #allocation3 [shape = 's32[1]{0}', space=sflag, size = 0x4, scoped, tag = 'scoped memory for tpu_custom_call.1']
    #allocation4 [shape = 's32[1]{0}', space=sflag, size = 0x4, scoped, tag = 'scoped memory for tpu_custom_call.1']
    #allocation5 [shape = 'u8[12288]{0}', space=vmem, size = 0x3000, scoped, tag = 'input window, operand 1, single buffered']
    #allocation6 [shape = 's32[1]{0}', space=sflag, size = 0x4, scoped, tag = 'scoped memory for tpu_custom_call.1']
    #allocation7 [shape = 'u8[786432]{0}', space=vmem, size = 0xc0000, scoped, tag = 'input window, operand 2, single buffered']
    #allocation8 [shape = 'u8[2048]{0}', space=vmem, size = 0x800, scoped, tag = 'input window, operand 3, single buffered']
    #allocation9 [shape = 's32[1]{0}', space=sflag, size = 0x4, scoped, tag = 'scoped memory for tpu_custom_call.1']
    #allocation10 [shape = 'u8[1048576]{0}', space=vmem, size = 0x100000, scoped, tag = 'input window, operand 4, single buffered']
    #allocation11 [shape = 'u8[512]{0}', space=vmem, size = 0x400, scoped, tag = 'output window, operand 0, single buffered']
    %11 = vsyncpa [#allocation3], 0
    %12 = vsyncpa [#allocation6], 0
    %13 = vsyncpa [#allocation9], 0
    %14 = vsyncpa [#allocation4], 0
    // Predicated region
    $region2: #{tpu_custom_call.1} parent=1 // pred_check
      _
    $region3: #{tpu_custom_call.1} parent=1 // pred_check_branch
      %16 = sbr.rel (0) target = $region5
    $region4: #{tpu_custom_call.1} parent=1 // pred_region
      %18 = vsyncadd [#allocation3], 0
      %s20 = sshll.u32 %s0, 4
      %s21 = int_to_ptr.hbm [resolvable:$true] %s20
      %s22 = sshll.u32 [#allocation2], 4
      %s23 = int_to_ptr.vmem [resolvable:$true] %s22
      %25 = dma.hbm_to_vmem [thread:$0]  %s21, 512, %s23, [#allocation3]
    $region5: #{tpu_custom_call.1} parent=1 // pred_fallthru
      _
    // Predicated region
    $region6: #{tpu_custom_call.1} parent=1 // pred_check
      _
    $region7: #{tpu_custom_call.1} parent=1 // pred_check_branch
      %27 = sbr.rel (0) target = $region9
    $region8: #{tpu_custom_call.1} parent=1 // pred_region
      %29 = vsyncadd [#allocation6], 0
      %s31 = sshll.u32 %s1, 4
      %s32 = int_to_ptr.hbm [resolvable:$true] %s31
      %s33 = sshll.u32 [#allocation5], 4
      %s34 = int_to_ptr.vmem [resolvable:$true] %s33
      %36 = dma.hbm_to_vmem [thread:$0]  %s32, 384, %s34, [#allocation6]
    $region9: #{tpu_custom_call.1} parent=1 // pred_fallthru
      _
    // Predicated region
    $region10: #{tpu_custom_call.1} parent=1 // pred_check
      _
    $region11: #{tpu_custom_call.1} parent=1 // pred_check_branch
      %38 = sbr.rel (0) target = $region13
    $region12: #{tpu_custom_call.1} parent=1 // pred_region
      %40 = vsyncadd [#allocation6], 0
      %s41 = sshll.u32 %s2, 4
      %s42 = int_to_ptr.hbm [resolvable:$true] %s41
      %s43 = sshll.u32 [#allocation7], 4
      %s44 = int_to_ptr.vmem [resolvable:$true] %s43
      %49 = dma.hbm_to_vmem [thread:$0]  %s42, 24576, %s44, [#allocation6], 512, 512, 32
    $region13: #{tpu_custom_call.1} parent=1 // pred_fallthru
      _
    // Predicated region
    $region14: #{tpu_custom_call.1} parent=1 // pred_check
      _
    $region15: #{tpu_custom_call.1} parent=1 // pred_check_branch
      %51 = sbr.rel (0) target = $region17
    $region16: #{tpu_custom_call.1} parent=1 // pred_region
      %53 = vsyncadd [#allocation9], 0
      %s55 = sshll.u32 %s3, 4
      %s56 = int_to_ptr.hbm [resolvable:$true] %s55
      %s57 = sshll.u32 [#allocation8], 4
      %s58 = int_to_ptr.vmem [resolvable:$true] %s57
      %60 = dma.hbm_to_vmem [thread:$0]  %s56, 64, %s58, [#allocation9]
    $region17: #{tpu_custom_call.1} parent=1 // pred_fallthru
      _
    // Predicated region
    $region18: #{tpu_custom_call.1} parent=1 // pred_check
      _
    $region19: #{tpu_custom_call.1} parent=1 // pred_check_branch
      %62 = sbr.rel (0) target = $region21
    $region20: #{tpu_custom_call.1} parent=1 // pred_region
      %64 = vsyncadd [#allocation9], 0
      %s65 = sshll.u32 %s4, 4
      %s66 = int_to_ptr.hbm [resolvable:$true] %s65
      %s67 = sshll.u32 [#allocation10], 4
      %s68 = int_to_ptr.vmem [resolvable:$true] %s67
      %73 = dma.hbm_to_vmem [thread:$0]  %s66, 32768, %s68, [#allocation9], 512, 512, 32
    $region21: #{tpu_custom_call.1} parent=1 // pred_fallthru
      _
    // Predicated region
    $region22: #{tpu_custom_call.1} parent=1 // pred_check
      _
    $region23: #{tpu_custom_call.1} parent=1 // pred_check_branch
      %75 = sbr.rel (0) target = $region25
    $region24: #{tpu_custom_call.1} parent=1 // pred_region
      _
    $region25: #{tpu_custom_call.1} parent=1 // pred_fallthru
      _
    // Predicated region
    $region26: #{tpu_custom_call.1} parent=1 // pred_check
      _
    $region27: #{tpu_custom_call.1} parent=1 // pred_check_branch
      %77 = sbr.rel (0) target = $region29
    $region28: #{tpu_custom_call.1} parent=1 // pred_region
      %79 = dma.done [#allocation3], 512
    $region29: #{tpu_custom_call.1} parent=1 // pred_fallthru
      _
    // Predicated region
    $region30: #{tpu_custom_call.1} parent=1 // pred_check
      _
    $region31: #{tpu_custom_call.1} parent=1 // pred_check_branch
      %81 = sbr.rel (0) target = $region33
    $region32: #{tpu_custom_call.1} parent=1 // pred_region
      %83 = dma.done [#allocation6], 384
    $region33: #{tpu_custom_call.1} parent=1 // pred_fallthru
      _
    // Predicated region
    $region34: #{tpu_custom_call.1} parent=1 // pred_check
      _
    $region35: #{tpu_custom_call.1} parent=1 // pred_check_branch
      %85 = sbr.rel (0) target = $region37
    $region36: #{tpu_custom_call.1} parent=1 // pred_region
      %87 = dma.done [#allocation6], 24576
    $region37: #{tpu_custom_call.1} parent=1 // pred_fallthru
      _
    // Predicated region
    $region38: #{tpu_custom_call.1} parent=1 // pred_check
      _
    $region39: #{tpu_custom_call.1} parent=1 // pred_check_branch
      %89 = sbr.rel (0) target = $region41
    $region40: #{tpu_custom_call.1} parent=1 // pred_region
      %91 = dma.done [#allocation9], 64
    $region41: #{tpu_custom_call.1} parent=1 // pred_fallthru
      _
    // Predicated region
    $region42: #{tpu_custom_call.1} parent=1 // pred_check
      _
    $region43: #{tpu_custom_call.1} parent=1 // pred_check_branch
      %93 = sbr.rel (0) target = $region45
    $region44: #{tpu_custom_call.1} parent=1 // pred_region
      %95 = dma.done [#allocation9], 32768
    $region45: #{tpu_custom_call.1} parent=1 // pred_fallthru
      _
    %p96 = scmp.eq.s32.totalorder 0, 0
    // Predicated region
    $region46: #{tpu_custom_call.1} parent=1 // pred_check
      %p97 = pneg %p96
    $region47: #{tpu_custom_call.1} parent=1 // pred_check_branch
      %99 = sbr.rel (%p97) target = $region49
    $region48: #{tpu_custom_call.1} parent=1 // pred_region
      %vm100 = vcmask 0
      %101 = vst.msk [vmem:[#allocation11] sm:$0x1] %vm100, 0.0
    $region49: #{tpu_custom_call.1} parent=1 // pred_fallthru
      _
    %v102 = vld [vmem:[#allocation5] sm:$0xff]
    %v103 = vld [vmem:[#allocation5 + $0x8] sm:$0xff]
    %v104 = vld [vmem:[#allocation5 + $0x10] sm:$0xff]
    %v105 = vld [vmem:[#allocation7] sm:$0xff]
    %v106 = vld [vmem:[#allocation7 + $0x8] sm:$0xff]
    %v107 = vld [vmem:[#allocation7 + $0x10] sm:$0xff]
    %v108 = vld [vmem:[#allocation7 + $0x18] sm:$0xff]
    %v109 = vld [vmem:[#allocation7 + $0x20] sm:$0xff]
    %v110 = vld [vmem:[#allocation7 + $0x28] sm:$0xff]
    %v111 = vld [vmem:[#allocation7 + $0x30] sm:$0xff]
    %v112 = vld [vmem:[#allocation7 + $0x38] sm:$0xff]
    %v113 = vld [vmem:[#allocation7 + $0x40] sm:$0xff]
    %v114 = vld [vmem:[#allocation7 + $0x48] sm:$0xff]
    %v115 = vld [vmem:[#allocation7 + $0x50] sm:$0xff]
    %v116 = vld [vmem:[#allocation7 + $0x58] sm:$0xff]
    %v117 = vld [vmem:[#allocation7 + $0x60] sm:$0xff]
    %v118 = vld [vmem:[#allocation7 + $0x68] sm:$0xff]
    %v119 = vld [vmem:[#allocation7 + $0x70] sm:$0xff]
    %v120 = vld [vmem:[#allocation7 + $0x78] sm:$0xff]
    %v121 = vld [vmem:[#allocation7 + $0x80] sm:$0xff]
    %v122 = vld [vmem:[#allocation7 + $0x88] sm:$0xff]
    %v123 = vld [vmem:[#allocation7 + $0x90] sm:$0xff]
    %v124 = vld [vmem:[#allocation7 + $0x98] sm:$0xff]
    %v125 = vld [vmem:[#allocation7 + $0xa0] sm:$0xff]
    %v126 = vld [vmem:[#allocation7 + $0xa8] sm:$0xff]
    %v127 = vld [vmem:[#allocation7 + $0xb0] sm:$0xff]
    %v128 = vld [vmem:[#allocation7 + $0xb8] sm:$0xff]
    %v129 = vld [vmem:[#allocation7 + $0xc0] sm:$0xff]
    %v130 = vld [vmem:[#allocation7 + $0xc8] sm:$0xff]
    %v131 = vld [vmem:[#allocation7 + $0xd0] sm:$0xff]
    %v132 = vld [vmem:[#allocation7 + $0xd8] sm:$0xff]
    %v133 = vld [vmem:[#allocation7 + $0xe0] sm:$0xff]
    %v134 = vld [vmem:[#allocation7 + $0xe8] sm:$0xff]
    %v135 = vld [vmem:[#allocation7 + $0xf0] sm:$0xff]
    %v136 = vld [vmem:[#allocation7 + $0xf8] sm:$0xff]
    %v137 = vld [vmem:[#allocation7 + $0x100] sm:$0xff]
    %v138 = vld [vmem:[#allocation7 + $0x108] sm:$0xff]
    %v139 = vld [vmem:[#allocation7 + $0x110] sm:$0xff]
    %v140 = vld [vmem:[#allocation7 + $0x118] sm:$0xff]
    %v141 = vld [vmem:[#allocation7 + $0x120] sm:$0xff]
    %v142 = vld [vmem:[#allocation7 + $0x128] sm:$0xff]
    %v143 = vld [vmem:[#allocation7 + $0x130] sm:$0xff]
    %v144 = vld [vmem:[#allocation7 + $0x138] sm:$0xff]
    %v145 = vld [vmem:[#allocation7 + $0x140] sm:$0xff]
    %v146 = vld [vmem:[#allocation7 + $0x148] sm:$0xff]
    %v147 = vld [vmem:[#allocation7 + $0x150] sm:$0xff]
    %v148 = vld [vmem:[#allocation7 + $0x158] sm:$0xff]
    %v149 = vld [vmem:[#allocation7 + $0x160] sm:$0xff]
    %v150 = vld [vmem:[#allocation7 + $0x168] sm:$0xff]
    %v151 = vld [vmem:[#allocation7 + $0x170] sm:$0xff]
    %v152 = vld [vmem:[#allocation7 + $0x178] sm:$0xff]
    %v153 = vld [vmem:[#allocation7 + $0x180] sm:$0xff]
    %v154 = vld [vmem:[#allocation7 + $0x188] sm:$0xff]
    %v155 = vld [vmem:[#allocation7 + $0x190] sm:$0xff]
    %v156 = vld [vmem:[#allocation7 + $0x198] sm:$0xff]
    %v157 = vld [vmem:[#allocation7 + $0x1a0] sm:$0xff]
    %v158 = vld [vmem:[#allocation7 + $0x1a8] sm:$0xff]
    %v159 = vld [vmem:[#allocation7 + $0x1b0] sm:$0xff]
    %v160 = vld [vmem:[#allocation7 + $0x1b8] sm:$0xff]
    %v161 = vld [vmem:[#allocation7 + $0x1c0] sm:$0xff]
    %v162 = vld [vmem:[#allocation7 + $0x1c8] sm:$0xff]
    %v163 = vld [vmem:[#allocation7 + $0x1d0] sm:$0xff]
    %v164 = vld [vmem:[#allocation7 + $0x1d8] sm:$0xff]
    %v165 = vld [vmem:[#allocation7 + $0x1e0] sm:$0xff]
    %v166 = vld [vmem:[#allocation7 + $0x1e8] sm:$0xff]
    %v167 = vld [vmem:[#allocation7 + $0x1f0] sm:$0xff]
    %v168 = vld [vmem:[#allocation7 + $0x1f8] sm:$0xff]
    %v169 = vld [vmem:[#allocation7 + $0x200] sm:$0xff]
    %v170 = vld [vmem:[#allocation7 + $0x208] sm:$0xff]
    %v171 = vld [vmem:[#allocation7 + $0x210] sm:$0xff]
    %v172 = vld [vmem:[#allocation7 + $0x218] sm:$0xff]
    %v173 = vld [vmem:[#allocation7 + $0x220] sm:$0xff]
    %v174 = vld [vmem:[#allocation7 + $0x228] sm:$0xff]
    %v175 = vld [vmem:[#allocation7 + $0x230] sm:$0xff]
    %v176 = vld [vmem:[#allocation7 + $0x238] sm:$0xff]
    %v177 = vld [vmem:[#allocation7 + $0x240] sm:$0xff]
    %v178 = vld [vmem:[#allocation7 + $0x248] sm:$0xff]
    %v179 = vld [vmem:[#allocation7 + $0x250] sm:$0xff]
    %v180 = vld [vmem:[#allocation7 + $0x258] sm:$0xff]
    %v181 = vld [vmem:[#allocation7 + $0x260] sm:$0xff]
    %v182 = vld [vmem:[#allocation7 + $0x268] sm:$0xff]
    %v183 = vld [vmem:[#allocation7 + $0x270] sm:$0xff]
    %v184 = vld [vmem:[#allocation7 + $0x278] sm:$0xff]
    %v185 = vld [vmem:[#allocation7 + $0x280] sm:$0xff]
    %v186 = vld [vmem:[#allocation7 + $0x288] sm:$0xff]
    %v187 = vld [vmem:[#allocation7 + $0x290] sm:$0xff]
    %v188 = vld [vmem:[#allocation7 + $0x298] sm:$0xff]
    %v189 = vld [vmem:[#allocation7 + $0x2a0] sm:$0xff]
    %v190 = vld [vmem:[#allocation7 + $0x2a8] sm:$0xff]
    %v191 = vld [vmem:[#allocation7 + $0x2b0] sm:$0xff]
    %v192 = vld [vmem:[#allocation7 + $0x2b8] sm:$0xff]
    %v193 = vld [vmem:[#allocation7 + $0x2c0] sm:$0xff]
    %v194 = vld [vmem:[#allocation7 + $0x2c8] sm:$0xff]
    %v195 = vld [vmem:[#allocation7 + $0x2d0] sm:$0xff]
    %v196 = vld [vmem:[#allocation7 + $0x2d8] sm:$0xff]
    %v197 = vld [vmem:[#allocation7 + $0x2e0] sm:$0xff]
    %v198 = vld [vmem:[#allocation7 + $0x2e8] sm:$0xff]
    %v199 = vld [vmem:[#allocation7 + $0x2f0] sm:$0xff]
    %v200 = vld [vmem:[#allocation7 + $0x2f8] sm:$0xff]
    %v201 = vld [vmem:[#allocation7 + $0x300] sm:$0xff]
    %v202 = vld [vmem:[#allocation7 + $0x308] sm:$0xff]
    %v203 = vld [vmem:[#allocation7 + $0x310] sm:$0xff]
    %v204 = vld [vmem:[#allocation7 + $0x318] sm:$0xff]
    %v205 = vld [vmem:[#allocation7 + $0x320] sm:$0xff]
    %v206 = vld [vmem:[#allocation7 + $0x328] sm:$0xff]
    %v207 = vld [vmem:[#allocation7 + $0x330] sm:$0xff]
    %v208 = vld [vmem:[#allocation7 + $0x338] sm:$0xff]
    %v209 = vld [vmem:[#allocation7 + $0x340] sm:$0xff]
    %v210 = vld [vmem:[#allocation7 + $0x348] sm:$0xff]
    %v211 = vld [vmem:[#allocation7 + $0x350] sm:$0xff]
    %v212 = vld [vmem:[#allocation7 + $0x358] sm:$0xff]
    %v213 = vld [vmem:[#allocation7 + $0x360] sm:$0xff]
    %v214 = vld [vmem:[#allocation7 + $0x368] sm:$0xff]
    %v215 = vld [vmem:[#allocation7 + $0x370] sm:$0xff]
    %v216 = vld [vmem:[#allocation7 + $0x378] sm:$0xff]
    %v217 = vld [vmem:[#allocation7 + $0x380] sm:$0xff]
    %v218 = vld [vmem:[#allocation7 + $0x388] sm:$0xff]
    %v219 = vld [vmem:[#allocation7 + $0x390] sm:$0xff]
    %v220 = vld [vmem:[#allocation7 + $0x398] sm:$0xff]
    %v221 = vld [vmem:[#allocation7 + $0x3a0] sm:$0xff]
    %v222 = vld [vmem:[#allocation7 + $0x3a8] sm:$0xff]
    %v223 = vld [vmem:[#allocation7 + $0x3b0] sm:$0xff]
    %v224 = vld [vmem:[#allocation7 + $0x3b8] sm:$0xff]
    %v225 = vld [vmem:[#allocation7 + $0x3c0] sm:$0xff]
    %v226 = vld [vmem:[#allocation7 + $0x3c8] sm:$0xff]
    %v227 = vld [vmem:[#allocation7 + $0x3d0] sm:$0xff]
    %v228 = vld [vmem:[#allocation7 + $0x3d8] sm:$0xff]
    %v229 = vld [vmem:[#allocation7 + $0x3e0] sm:$0xff]
    %v230 = vld [vmem:[#allocation7 + $0x3e8] sm:$0xff]
    %v231 = vld [vmem:[#allocation7 + $0x3f0] sm:$0xff]
    %v232 = vld [vmem:[#allocation7 + $0x3f8] sm:$0xff]
    %v233 = vld [vmem:[#allocation7 + $0x400] sm:$0xff]
    %v234 = vld [vmem:[#allocation7 + $0x408] sm:$0xff]
    %v235 = vld [vmem:[#allocation7 + $0x410] sm:$0xff]
    %v236 = vld [vmem:[#allocation7 + $0x418] sm:$0xff]
    %v237 = vld [vmem:[#allocation7 + $0x420] sm:$0xff]
    %v238 = vld [vmem:[#allocation7 + $0x428] sm:$0xff]
    %v239 = vld [vmem:[#allocation7 + $0x430] sm:$0xff]
    %v240 = vld [vmem:[#allocation7 + $0x438] sm:$0xff]
    %v241 = vld [vmem:[#allocation7 + $0x440] sm:$0xff]
    %v242 = vld [vmem:[#allocation7 + $0x448] sm:$0xff]
    %v243 = vld [vmem:[#allocation7 + $0x450] sm:$0xff]
    %v244 = vld [vmem:[#allocation7 + $0x458] sm:$0xff]
    %v245 = vld [vmem:[#allocation7 + $0x460] sm:$0xff]
    %v246 = vld [vmem:[#allocation7 + $0x468] sm:$0xff]
    %v247 = vld [vmem:[#allocation7 + $0x470] sm:$0xff]
    %v248 = vld [vmem:[#allocation7 + $0x478] sm:$0xff]
    %v249 = vld [vmem:[#allocation7 + $0x480] sm:$0xff]
    %v250 = vld [vmem:[#allocation7 + $0x488] sm:$0xff]
    %v251 = vld [vmem:[#allocation7 + $0x490] sm:$0xff]
    %v252 = vld [vmem:[#allocation7 + $0x498] sm:$0xff]
    %v253 = vld [vmem:[#allocation7 + $0x4a0] sm:$0xff]
    %v254 = vld [vmem:[#allocation7 + $0x4a8] sm:$0xff]
    %v255 = vld [vmem:[#allocation7 + $0x4b0] sm:$0xff]
    %v256 = vld [vmem:[#allocation7 + $0x4b8] sm:$0xff]
    %v257 = vld [vmem:[#allocation7 + $0x4c0] sm:$0xff]
    %v258 = vld [vmem:[#allocation7 + $0x4c8] sm:$0xff]
    %v259 = vld [vmem:[#allocation7 + $0x4d0] sm:$0xff]
    %v260 = vld [vmem:[#allocation7 + $0x4d8] sm:$0xff]
    %v261 = vld [vmem:[#allocation7 + $0x4e0] sm:$0xff]
    %v262 = vld [vmem:[#allocation7 + $0x4e8] sm:$0xff]
    %v263 = vld [vmem:[#allocation7 + $0x4f0] sm:$0xff]
    %v264 = vld [vmem:[#allocation7 + $0x4f8] sm:$0xff]
    %v265 = vld [vmem:[#allocation7 + $0x500] sm:$0xff]
    %v266 = vld [vmem:[#allocation7 + $0x508] sm:$0xff]
    %v267 = vld [vmem:[#allocation7 + $0x510] sm:$0xff]
    %v268 = vld [vmem:[#allocation7 + $0x518] sm:$0xff]
    %v269 = vld [vmem:[#allocation7 + $0x520] sm:$0xff]
    %v270 = vld [vmem:[#allocation7 + $0x528] sm:$0xff]
    %v271 = vld [vmem:[#allocation7 + $0x530] sm:$0xff]
    %v272 = vld [vmem:[#allocation7 + $0x538] sm:$0xff]
    %v273 = vld [vmem:[#allocation7 + $0x540] sm:$0xff]
    %v274 = vld [vmem:[#allocation7 + $0x548] sm:$0xff]
    %v275 = vld [vmem:[#allocation7 + $0x550] sm:$0xff]
    %v276 = vld [vmem:[#allocation7 + $0x558] sm:$0xff]
    %v277 = vld [vmem:[#allocation7 + $0x560] sm:$0xff]
    %v278 = vld [vmem:[#allocation7 + $0x568] sm:$0xff]
    %v279 = vld [vmem:[#allocation7 + $0x570] sm:$0xff]
    %v280 = vld [vmem:[#allocation7 + $0x578] sm:$0xff]
    %v281 = vld [vmem:[#allocation7 + $0x580] sm:$0xff]
    %v282 = vld [vmem:[#allocation7 + $0x588] sm:$0xff]
    %v283 = vld [vmem:[#allocation7 + $0x590] sm:$0xff]
    %v284 = vld [vmem:[#allocation7 + $0x598] sm:$0xff]
    %v285 = vld [vmem:[#allocation7 + $0x5a0] sm:$0xff]
    %v286 = vld [vmem:[#allocation7 + $0x5a8] sm:$0xff]
    %v287 = vld [vmem:[#allocation7 + $0x5b0] sm:$0xff]
    %v288 = vld [vmem:[#allocation7 + $0x5b8] sm:$0xff]
    %v289 = vld [vmem:[#allocation7 + $0x5c0] sm:$0xff]
    %v290 = vld [vmem:[#allocation7 + $0x5c8] sm:$0xff]
    %v291 = vld [vmem:[#allocation7 + $0x5d0] sm:$0xff]
    %v292 = vld [vmem:[#allocation7 + $0x5d8] sm:$0xff]
    %v293 = vld [vmem:[#allocation7 + $0x5e0] sm:$0xff]
    %v294 = vld [vmem:[#allocation7 + $0x5e8] sm:$0xff]
    %v295 = vld [vmem:[#allocation7 + $0x5f0] sm:$0xff]
    %v296 = vld [vmem:[#allocation7 + $0x5f8] sm:$0xff]
    %v297 = vld [vmem:[#allocation8] sm:$0xf]
    %v299 = vperm.slane %v297, 0
    %v300 = vperm.slane %v297, 1
    %v301 = vperm.slane %v297, 2
    %v302 = vperm.slane %v297, 3
    %307 = vmatpush.msra.mxu0 %v165
    %308 = vmatpush.msra.mxu0 %v161
    %309 = vmatpush.msra.mxu0 %v157
    %310 = vmatpush.msra.mxu0 %v153
    %311 = vmatpush.msra.mxu0 %v149
    %312 = vmatpush.msra.mxu0 %v145
    %313 = vmatpush.msra.mxu0 %v141
    %314 = vmatpush.msra.mxu0 %v137
    %315 = vmatpush.msra.mxu0 %v133
    %316 = vmatpush.msra.mxu0 %v129
    %317 = vmatpush.msra.mxu0 %v125
    %318 = vmatpush.msra.mxu0 %v121
    %319 = vmatpush.msra.mxu0 %v117
    %320 = vmatpush.msra.mxu0 %v113
    %321 = vmatpush.msra.mxu0 %v109
    %322 = vmatpush.msra.mxu0 %v105
    %323 = vmatmul.f32.gmra.mxu0 %v102
    %v324 = vpop.f32.mrf.mxu0
    %v325 = vadd.f32 %v299, %v324
    %326 = vdwg.mxu0
    %327 = vmatpush.msra.mxu0 %v229
    %328 = vmatpush.msra.mxu0 %v225
    %329 = vmatpush.msra.mxu0 %v221
    %330 = vmatpush.msra.mxu0 %v217
    %331 = vmatpush.msra.mxu0 %v213
    %332 = vmatpush.msra.mxu0 %v209
    %333 = vmatpush.msra.mxu0 %v205
    %334 = vmatpush.msra.mxu0 %v201
    %335 = vmatpush.msra.mxu0 %v197
    %336 = vmatpush.msra.mxu0 %v193
    %337 = vmatpush.msra.mxu0 %v189
    %338 = vmatpush.msra.mxu0 %v185
    %339 = vmatpush.msra.mxu0 %v181
    %340 = vmatpush.msra.mxu0 %v177
    %341 = vmatpush.msra.mxu0 %v173
    %342 = vmatpush.msra.mxu0 %v169
    %343 = vmatmul.f32.gmra.mxu0 %v103
    %v344 = vpop.f32.mrf.mxu0
    %v345 = vadd.f32 %v325, %v344
    %346 = vdwg.mxu0
    %347 = vmatpush.msra.mxu0 %v293
    %348 = vmatpush.msra.mxu0 %v289
    %349 = vmatpush.msra.mxu0 %v285
    %350 = vmatpush.msra.mxu0 %v281
    %351 = vmatpush.msra.mxu0 %v277
    %352 = vmatpush.msra.mxu0 %v273
    %353 = vmatpush.msra.mxu0 %v269
    %354 = vmatpush.msra.mxu0 %v265
    %355 = vmatpush.msra.mxu0 %v261
    %356 = vmatpush.msra.mxu0 %v257
    %357 = vmatpush.msra.mxu0 %v253
    %358 = vmatpush.msra.mxu0 %v249
    %359 = vmatpush.msra.mxu0 %v245
    %360 = vmatpush.msra.mxu0 %v241
    %361 = vmatpush.msra.mxu0 %v237
    %362 = vmatpush.msra.mxu0 %v233
    %363 = vmatmul.f32.gmra.mxu0 %v104
    %v364 = vpop.f32.mrf.mxu0
    %v365 = vadd.f32 %v345, %v364
    %366 = vdwg.mxu0
    %367 = vmatpush.msra.mxu0 %v166
    %368 = vmatpush.msra.mxu0 %v162
    %369 = vmatpush.msra.mxu0 %v158
    %370 = vmatpush.msra.mxu0 %v154
    %371 = vmatpush.msra.mxu0 %v150
    %372 = vmatpush.msra.mxu0 %v146
    %373 = vmatpush.msra.mxu0 %v142
    %374 = vmatpush.msra.mxu0 %v138
    %375 = vmatpush.msra.mxu0 %v134
    %376 = vmatpush.msra.mxu0 %v130
    %377 = vmatpush.msra.mxu0 %v126
    %378 = vmatpush.msra.mxu0 %v122
    %379 = vmatpush.msra.mxu0 %v118
    %380 = vmatpush.msra.mxu0 %v114
    %381 = vmatpush.msra.mxu0 %v110
    %382 = vmatpush.msra.mxu0 %v106
    %383 = vmatmul.f32.gmra.mxu0 %v102
    %v384 = vpop.f32.mrf.mxu0
    %v385 = vadd.f32 %v300, %v384
    %386 = vdwg.mxu0
    %387 = vmatpush.msra.mxu0 %v230
    %388 = vmatpush.msra.mxu0 %v226
    %389 = vmatpush.msra.mxu0 %v222
    %390 = vmatpush.msra.mxu0 %v218
    %391 = vmatpush.msra.mxu0 %v214
    %392 = vmatpush.msra.mxu0 %v210
    %393 = vmatpush.msra.mxu0 %v206
    %394 = vmatpush.msra.mxu0 %v202
    %395 = vmatpush.msra.mxu0 %v198
    %396 = vmatpush.msra.mxu0 %v194
    %397 = vmatpush.msra.mxu0 %v190
    %398 = vmatpush.msra.mxu0 %v186
    %399 = vmatpush.msra.mxu0 %v182
    %400 = vmatpush.msra.mxu0 %v178
    %401 = vmatpush.msra.mxu0 %v174
    %402 = vmatpush.msra.mxu0 %v170
    %403 = vmatmul.f32.gmra.mxu0 %v103
    %v404 = vpop.f32.mrf.mxu0
    %v405 = vadd.f32 %v385, %v404
    %406 = vdwg.mxu0
    %407 = vmatpush.msra.mxu0 %v294
    %408 = vmatpush.msra.mxu0 %v290
    %409 = vmatpush.msra.mxu0 %v286
    %410 = vmatpush.msra.mxu0 %v282
    %411 = vmatpush.msra.mxu0 %v278
    %412 = vmatpush.msra.mxu0 %v274
    %413 = vmatpush.msra.mxu0 %v270
    %414 = vmatpush.msra.mxu0 %v266
    %415 = vmatpush.msra.mxu0 %v262
    %416 = vmatpush.msra.mxu0 %v258
    %417 = vmatpush.msra.mxu0 %v254
    %418 = vmatpush.msra.mxu0 %v250
    %419 = vmatpush.msra.mxu0 %v246
    %420 = vmatpush.msra.mxu0 %v242
    %421 = vmatpush.msra.mxu0 %v238
    %422 = vmatpush.msra.mxu0 %v234
    %423 = vmatmul.f32.gmra.mxu0 %v104
    %v424 = vpop.f32.mrf.mxu0
    %v425 = vadd.f32 %v405, %v424
    %426 = vdwg.mxu0
    %427 = vmatpush.msra.mxu0 %v167
    %428 = vmatpush.msra.mxu0 %v163
    %429 = vmatpush.msra.mxu0 %v159
    %430 = vmatpush.msra.mxu0 %v155
    %431 = vmatpush.msra.mxu0 %v151
    %432 = vmatpush.msra.mxu0 %v147
    %433 = vmatpush.msra.mxu0 %v143
    %434 = vmatpush.msra.mxu0 %v139
    %435 = vmatpush.msra.mxu0 %v135
    %436 = vmatpush.msra.mxu0 %v131
    %437 = vmatpush.msra.mxu0 %v127
    %438 = vmatpush.msra.mxu0 %v123
    %439 = vmatpush.msra.mxu0 %v119
    %440 = vmatpush.msra.mxu0 %v115
    %441 = vmatpush.msra.mxu0 %v111
    %442 = vmatpush.msra.mxu0 %v107
    %443 = vmatmul.f32.gmra.mxu0 %v102
    %v444 = vpop.f32.mrf.mxu0
    %v445 = vadd.f32 %v301, %v444
    %446 = vdwg.mxu0
    %447 = vmatpush.msra.mxu0 %v231
    %448 = vmatpush.msra.mxu0 %v227
    %449 = vmatpush.msra.mxu0 %v223
    %450 = vmatpush.msra.mxu0 %v219
    %451 = vmatpush.msra.mxu0 %v215
    %452 = vmatpush.msra.mxu0 %v211
    %453 = vmatpush.msra.mxu0 %v207
    %454 = vmatpush.msra.mxu0 %v203
    %455 = vmatpush.msra.mxu0 %v199
    %456 = vmatpush.msra.mxu0 %v195
    %457 = vmatpush.msra.mxu0 %v191
    %458 = vmatpush.msra.mxu0 %v187
    %459 = vmatpush.msra.mxu0 %v183
    %460 = vmatpush.msra.mxu0 %v179
    %461 = vmatpush.msra.mxu0 %v175
    %462 = vmatpush.msra.mxu0 %v171
    %463 = vmatmul.f32.gmra.mxu0 %v103
    %v464 = vpop.f32.mrf.mxu0
    %v465 = vadd.f32 %v445, %v464
    %466 = vdwg.mxu0
    %467 = vmatpush.msra.mxu0 %v295
    %468 = vmatpush.msra.mxu0 %v291
    %469 = vmatpush.msra.mxu0 %v287
    %470 = vmatpush.msra.mxu0 %v283
    %471 = vmatpush.msra.mxu0 %v279
    %472 = vmatpush.msra.mxu0 %v275
    %473 = vmatpush.msra.mxu0 %v271
    %474 = vmatpush.msra.mxu0 %v267
    %475 = vmatpush.msra.mxu0 %v263
    %476 = vmatpush.msra.mxu0 %v259
    %477 = vmatpush.msra.mxu0 %v255
    %478 = vmatpush.msra.mxu0 %v251
    %479 = vmatpush.msra.mxu0 %v247
    %480 = vmatpush.msra.mxu0 %v243
    %481 = vmatpush.msra.mxu0 %v239
    %482 = vmatpush.msra.mxu0 %v235
    %483 = vmatmul.f32.gmra.mxu0 %v104
    %v484 = vpop.f32.mrf.mxu0
    %v485 = vadd.f32 %v465, %v484
    %486 = vdwg.mxu0
    %487 = vmatpush.msra.mxu0 %v168
    %488 = vmatpush.msra.mxu0 %v164
    %489 = vmatpush.msra.mxu0 %v160
    %490 = vmatpush.msra.mxu0 %v156
    %491 = vmatpush.msra.mxu0 %v152
    %492 = vmatpush.msra.mxu0 %v148
    %493 = vmatpush.msra.mxu0 %v144
    %494 = vmatpush.msra.mxu0 %v140
    %495 = vmatpush.msra.mxu0 %v136
    %496 = vmatpush.msra.mxu0 %v132
    %497 = vmatpush.msra.mxu0 %v128
    %498 = vmatpush.msra.mxu0 %v124
    %499 = vmatpush.msra.mxu0 %v120
    %500 = vmatpush.msra.mxu0 %v116
    %501 = vmatpush.msra.mxu0 %v112
    %502 = vmatpush.msra.mxu0 %v108
    %503 = vmatmul.f32.gmra.mxu0 %v102
    %v504 = vpop.f32.mrf.mxu0
    %v505 = vadd.f32 %v302, %v504
    %506 = vdwg.mxu0
    %507 = vmatpush.msra.mxu0 %v232
    %508 = vmatpush.msra.mxu0 %v228
    %509 = vmatpush.msra.mxu0 %v224
    %510 = vmatpush.msra.mxu0 %v220
    %511 = vmatpush.msra.mxu0 %v216
    %512 = vmatpush.msra.mxu0 %v212
    %513 = vmatpush.msra.mxu0 %v208
    %514 = vmatpush.msra.mxu0 %v204
    %515 = vmatpush.msra.mxu0 %v200
    %516 = vmatpush.msra.mxu0 %v196
    %517 = vmatpush.msra.mxu0 %v192
    %518 = vmatpush.msra.mxu0 %v188
    %519 = vmatpush.msra.mxu0 %v184
    %520 = vmatpush.msra.mxu0 %v180
    %521 = vmatpush.msra.mxu0 %v176
    %522 = vmatpush.msra.mxu0 %v172
    %523 = vmatmul.f32.gmra.mxu0 %v103
    %v524 = vpop.f32.mrf.mxu0
    %v525 = vadd.f32 %v505, %v524
    %526 = vdwg.mxu0
    %527 = vmatpush.msra.mxu0 %v296
    %528 = vmatpush.msra.mxu0 %v292
    %529 = vmatpush.msra.mxu0 %v288
    %530 = vmatpush.msra.mxu0 %v284
    %531 = vmatpush.msra.mxu0 %v280
    %532 = vmatpush.msra.mxu0 %v276
    %533 = vmatpush.msra.mxu0 %v272
    %534 = vmatpush.msra.mxu0 %v268
    %535 = vmatpush.msra.mxu0 %v264
    %536 = vmatpush.msra.mxu0 %v260
    %537 = vmatpush.msra.mxu0 %v256
    %538 = vmatpush.msra.mxu0 %v252
    %539 = vmatpush.msra.mxu0 %v248
    %540 = vmatpush.msra.mxu0 %v244
    %541 = vmatpush.msra.mxu0 %v240
    %542 = vmatpush.msra.mxu0 %v236
    %543 = vmatmul.f32.gmra.mxu0 %v104
    %v544 = vpop.f32.mrf.mxu0
    %v545 = vadd.f32 %v525, %v544
    %546 = vdwg.mxu0
    %v547 = vmax.f32 %v365, 0.0
    %v548 = vmax.f32 %v425, 0.0
    %v549 = vmax.f32 %v485, 0.0
    %v550 = vmax.f32 %v545, 0.0
    %v551 = vld [vmem:[#allocation10] sm:$0xff]
    %v552 = vld [vmem:[#allocation10 + $0x8] sm:$0xff]
    %v553 = vld [vmem:[#allocation10 + $0x10] sm:$0xff]
    %v554 = vld [vmem:[#allocation10 + $0x18] sm:$0xff]
    %v555 = vld [vmem:[#allocation10 + $0x20] sm:$0xff]
    %v556 = vld [vmem:[#allocation10 + $0x28] sm:$0xff]
    %v557 = vld [vmem:[#allocation10 + $0x30] sm:$0xff]
    %v558 = vld [vmem:[#allocation10 + $0x38] sm:$0xff]
    %v559 = vld [vmem:[#allocation10 + $0x40] sm:$0xff]
    %v560 = vld [vmem:[#allocation10 + $0x48] sm:$0xff]
    %v561 = vld [vmem:[#allocation10 + $0x50] sm:$0xff]
    %v562 = vld [vmem:[#allocation10 + $0x58] sm:$0xff]
    %v563 = vld [vmem:[#allocation10 + $0x60] sm:$0xff]
    %v564 = vld [vmem:[#allocation10 + $0x68] sm:$0xff]
    %v565 = vld [vmem:[#allocation10 + $0x70] sm:$0xff]
    %v566 = vld [vmem:[#allocation10 + $0x78] sm:$0xff]
    %v567 = vld [vmem:[#allocation10 + $0x80] sm:$0xff]
    %v568 = vld [vmem:[#allocation10 + $0x88] sm:$0xff]
    %v569 = vld [vmem:[#allocation10 + $0x90] sm:$0xff]
    %v570 = vld [vmem:[#allocation10 + $0x98] sm:$0xff]
    %v571 = vld [vmem:[#allocation10 + $0xa0] sm:$0xff]
    %v572 = vld [vmem:[#allocation10 + $0xa8] sm:$0xff]
    %v573 = vld [vmem:[#allocation10 + $0xb0] sm:$0xff]
    %v574 = vld [vmem:[#allocation10 + $0xb8] sm:$0xff]
    %v575 = vld [vmem:[#allocation10 + $0xc0] sm:$0xff]
    %v576 = vld [vmem:[#allocation10 + $0xc8] sm:$0xff]
    %v577 = vld [vmem:[#allocation10 + $0xd0] sm:$0xff]
    %v578 = vld [vmem:[#allocation10 + $0xd8] sm:$0xff]
    %v579 = vld [vmem:[#allocation10 + $0xe0] sm:$0xff]
    %v580 = vld [vmem:[#allocation10 + $0xe8] sm:$0xff]
    %v581 = vld [vmem:[#allocation10 + $0xf0] sm:$0xff]
    %v582 = vld [vmem:[#allocation10 + $0xf8] sm:$0xff]
    %v583 = vld [vmem:[#allocation10 + $0x100] sm:$0xff]
    %v584 = vld [vmem:[#allocation10 + $0x108] sm:$0xff]
    %v585 = vld [vmem:[#allocation10 + $0x110] sm:$0xff]
    %v586 = vld [vmem:[#allocation10 + $0x118] sm:$0xff]
    %v587 = vld [vmem:[#allocation10 + $0x120] sm:$0xff]
    %v588 = vld [vmem:[#allocation10 + $0x128] sm:$0xff]
    %v589 = vld [vmem:[#allocation10 + $0x130] sm:$0xff]
    %v590 = vld [vmem:[#allocation10 + $0x138] sm:$0xff]
    %v591 = vld [vmem:[#allocation10 + $0x140] sm:$0xff]
    %v592 = vld [vmem:[#allocation10 + $0x148] sm:$0xff]
    %v593 = vld [vmem:[#allocation10 + $0x150] sm:$0xff]
    %v594 = vld [vmem:[#allocation10 + $0x158] sm:$0xff]
    %v595 = vld [vmem:[#allocation10 + $0x160] sm:$0xff]
    %v596 = vld [vmem:[#allocation10 + $0x168] sm:$0xff]
    %v597 = vld [vmem:[#allocation10 + $0x170] sm:$0xff]
    %v598 = vld [vmem:[#allocation10 + $0x178] sm:$0xff]
    %v599 = vld [vmem:[#allocation10 + $0x180] sm:$0xff]
    %v600 = vld [vmem:[#allocation10 + $0x188] sm:$0xff]
    %v601 = vld [vmem:[#allocation10 + $0x190] sm:$0xff]
    %v602 = vld [vmem:[#allocation10 + $0x198] sm:$0xff]
    %v603 = vld [vmem:[#allocation10 + $0x1a0] sm:$0xff]
    %v604 = vld [vmem:[#allocation10 + $0x1a8] sm:$0xff]
    %v605 = vld [vmem:[#allocation10 + $0x1b0] sm:$0xff]
    %v606 = vld [vmem:[#allocation10 + $0x1b8] sm:$0xff]
    %v607 = vld [vmem:[#allocation10 + $0x1c0] sm:$0xff]
    %v608 = vld [vmem:[#allocation10 + $0x1c8] sm:$0xff]
    %v609 = vld [vmem:[#allocation10 + $0x1d0] sm:$0xff]
    %v610 = vld [vmem:[#allocation10 + $0x1d8] sm:$0xff]
    %v611 = vld [vmem:[#allocation10 + $0x1e0] sm:$0xff]
    %v612 = vld [vmem:[#allocation10 + $0x1e8] sm:$0xff]
    %v613 = vld [vmem:[#allocation10 + $0x1f0] sm:$0xff]
    %v614 = vld [vmem:[#allocation10 + $0x1f8] sm:$0xff]
    %v615 = vld [vmem:[#allocation10 + $0x200] sm:$0xff]
    %v616 = vld [vmem:[#allocation10 + $0x208] sm:$0xff]
    %v617 = vld [vmem:[#allocation10 + $0x210] sm:$0xff]
    %v618 = vld [vmem:[#allocation10 + $0x218] sm:$0xff]
    %v619 = vld [vmem:[#allocation10 + $0x220] sm:$0xff]
    %v620 = vld [vmem:[#allocation10 + $0x228] sm:$0xff]
    %v621 = vld [vmem:[#allocation10 + $0x230] sm:$0xff]
    %v622 = vld [vmem:[#allocation10 + $0x238] sm:$0xff]
    %v623 = vld [vmem:[#allocation10 + $0x240] sm:$0xff]
    %v624 = vld [vmem:[#allocation10 + $0x248] sm:$0xff]
    %v625 = vld [vmem:[#allocation10 + $0x250] sm:$0xff]
    %v626 = vld [vmem:[#allocation10 + $0x258] sm:$0xff]
    %v627 = vld [vmem:[#allocation10 + $0x260] sm:$0xff]
    %v628 = vld [vmem:[#allocation10 + $0x268] sm:$0xff]
    %v629 = vld [vmem:[#allocation10 + $0x270] sm:$0xff]
    %v630 = vld [vmem:[#allocation10 + $0x278] sm:$0xff]
    %v631 = vld [vmem:[#allocation10 + $0x280] sm:$0xff]
    %v632 = vld [vmem:[#allocation10 + $0x288] sm:$0xff]
    %v633 = vld [vmem:[#allocation10 + $0x290] sm:$0xff]
    %v634 = vld [vmem:[#allocation10 + $0x298] sm:$0xff]
    %v635 = vld [vmem:[#allocation10 + $0x2a0] sm:$0xff]
    %v636 = vld [vmem:[#allocation10 + $0x2a8] sm:$0xff]
    %v637 = vld [vmem:[#allocation10 + $0x2b0] sm:$0xff]
    %v638 = vld [vmem:[#allocation10 + $0x2b8] sm:$0xff]
    %v639 = vld [vmem:[#allocation10 + $0x2c0] sm:$0xff]
    %v640 = vld [vmem:[#allocation10 + $0x2c8] sm:$0xff]
    %v641 = vld [vmem:[#allocation10 + $0x2d0] sm:$0xff]
    %v642 = vld [vmem:[#allocation10 + $0x2d8] sm:$0xff]
    %v643 = vld [vmem:[#allocation10 + $0x2e0] sm:$0xff]
    %v644 = vld [vmem:[#allocation10 + $0x2e8] sm:$0xff]
    %v645 = vld [vmem:[#allocation10 + $0x2f0] sm:$0xff]
    %v646 = vld [vmem:[#allocation10 + $0x2f8] sm:$0xff]
    %v647 = vld [vmem:[#allocation10 + $0x300] sm:$0xff]
    %v648 = vld [vmem:[#allocation10 + $0x308] sm:$0xff]
    %v649 = vld [vmem:[#allocation10 + $0x310] sm:$0xff]
    %v650 = vld [vmem:[#allocation10 + $0x318] sm:$0xff]
    %v651 = vld [vmem:[#allocation10 + $0x320] sm:$0xff]
    %v652 = vld [vmem:[#allocation10 + $0x328] sm:$0xff]
    %v653 = vld [vmem:[#allocation10 + $0x330] sm:$0xff]
    %v654 = vld [vmem:[#allocation10 + $0x338] sm:$0xff]
    %v655 = vld [vmem:[#allocation10 + $0x340] sm:$0xff]
    %v656 = vld [vmem:[#allocation10 + $0x348] sm:$0xff]
    %v657 = vld [vmem:[#allocation10 + $0x350] sm:$0xff]
    %v658 = vld [vmem:[#allocation10 + $0x358] sm:$0xff]
    %v659 = vld [vmem:[#allocation10 + $0x360] sm:$0xff]
    %v660 = vld [vmem:[#allocation10 + $0x368] sm:$0xff]
    %v661 = vld [vmem:[#allocation10 + $0x370] sm:$0xff]
    %v662 = vld [vmem:[#allocation10 + $0x378] sm:$0xff]
    %v663 = vld [vmem:[#allocation10 + $0x380] sm:$0xff]
    %v664 = vld [vmem:[#allocation10 + $0x388] sm:$0xff]
    %v665 = vld [vmem:[#allocation10 + $0x390] sm:$0xff]
    %v666 = vld [vmem:[#allocation10 + $0x398] sm:$0xff]
    %v667 = vld [vmem:[#allocation10 + $0x3a0] sm:$0xff]
    %v668 = vld [vmem:[#allocation10 + $0x3a8] sm:$0xff]
    %v669 = vld [vmem:[#allocation10 + $0x3b0] sm:$0xff]
    %v670 = vld [vmem:[#allocation10 + $0x3b8] sm:$0xff]
    %v671 = vld [vmem:[#allocation10 + $0x3c0] sm:$0xff]
    %v672 = vld [vmem:[#allocation10 + $0x3c8] sm:$0xff]
    %v673 = vld [vmem:[#allocation10 + $0x3d0] sm:$0xff]
    %v674 = vld [vmem:[#allocation10 + $0x3d8] sm:$0xff]
    %v675 = vld [vmem:[#allocation10 + $0x3e0] sm:$0xff]
    %v676 = vld [vmem:[#allocation10 + $0x3e8] sm:$0xff]
    %v677 = vld [vmem:[#allocation10 + $0x3f0] sm:$0xff]
    %v678 = vld [vmem:[#allocation10 + $0x3f8] sm:$0xff]
    %v679 = vld [vmem:[#allocation10 + $0x400] sm:$0xff]
    %v680 = vld [vmem:[#allocation10 + $0x408] sm:$0xff]
    %v681 = vld [vmem:[#allocation10 + $0x410] sm:$0xff]
    %v682 = vld [vmem:[#allocation10 + $0x418] sm:$0xff]
    %v683 = vld [vmem:[#allocation10 + $0x420] sm:$0xff]
    %v684 = vld [vmem:[#allocation10 + $0x428] sm:$0xff]
    %v685 = vld [vmem:[#allocation10 + $0x430] sm:$0xff]
    %v686 = vld [vmem:[#allocation10 + $0x438] sm:$0xff]
    %v687 = vld [vmem:[#allocation10 + $0x440] sm:$0xff]
    %v688 = vld [vmem:[#allocation10 + $0x448] sm:$0xff]
    %v689 = vld [vmem:[#allocation10 + $0x450] sm:$0xff]
    %v690 = vld [vmem:[#allocation10 + $0x458] sm:$0xff]
    %v691 = vld [vmem:[#allocation10 + $0x460] sm:$0xff]
    %v692 = vld [vmem:[#allocation10 + $0x468] sm:$0xff]
    %v693 = vld [vmem:[#allocation10 + $0x470] sm:$0xff]
    %v694 = vld [vmem:[#allocation10 + $0x478] sm:$0xff]
    %v695 = vld [vmem:[#allocation10 + $0x480] sm:$0xff]
    %v696 = vld [vmem:[#allocation10 + $0x488] sm:$0xff]
    %v697 = vld [vmem:[#allocation10 + $0x490] sm:$0xff]
    %v698 = vld [vmem:[#allocation10 + $0x498] sm:$0xff]
    %v699 = vld [vmem:[#allocation10 + $0x4a0] sm:$0xff]
    %v700 = vld [vmem:[#allocation10 + $0x4a8] sm:$0xff]
    %v701 = vld [vmem:[#allocation10 + $0x4b0] sm:$0xff]
    %v702 = vld [vmem:[#allocation10 + $0x4b8] sm:$0xff]
    %v703 = vld [vmem:[#allocation10 + $0x4c0] sm:$0xff]
    %v704 = vld [vmem:[#allocation10 + $0x4c8] sm:$0xff]
    %v705 = vld [vmem:[#allocation10 + $0x4d0] sm:$0xff]
    %v706 = vld [vmem:[#allocation10 + $0x4d8] sm:$0xff]
    %v707 = vld [vmem:[#allocation10 + $0x4e0] sm:$0xff]
    %v708 = vld [vmem:[#allocation10 + $0x4e8] sm:$0xff]
    %v709 = vld [vmem:[#allocation10 + $0x4f0] sm:$0xff]
    %v710 = vld [vmem:[#allocation10 + $0x4f8] sm:$0xff]
    %v711 = vld [vmem:[#allocation10 + $0x500] sm:$0xff]
    %v712 = vld [vmem:[#allocation10 + $0x508] sm:$0xff]
    %v713 = vld [vmem:[#allocation10 + $0x510] sm:$0xff]
    %v714 = vld [vmem:[#allocation10 + $0x518] sm:$0xff]
    %v715 = vld [vmem:[#allocation10 + $0x520] sm:$0xff]
    %v716 = vld [vmem:[#allocation10 + $0x528] sm:$0xff]
    %v717 = vld [vmem:[#allocation10 + $0x530] sm:$0xff]
    %v718 = vld [vmem:[#allocation10 + $0x538] sm:$0xff]
    %v719 = vld [vmem:[#allocation10 + $0x540] sm:$0xff]
    %v720 = vld [vmem:[#allocation10 + $0x548] sm:$0xff]
    %v721 = vld [vmem:[#allocation10 + $0x550] sm:$0xff]
    %v722 = vld [vmem:[#allocation10 + $0x558] sm:$0xff]
    %v723 = vld [vmem:[#allocation10 + $0x560] sm:$0xff]
    %v724 = vld [vmem:[#allocation10 + $0x568] sm:$0xff]
    %v725 = vld [vmem:[#allocation10 + $0x570] sm:$0xff]
    %v726 = vld [vmem:[#allocation10 + $0x578] sm:$0xff]
    %v727 = vld [vmem:[#allocation10 + $0x580] sm:$0xff]
    %v728 = vld [vmem:[#allocation10 + $0x588] sm:$0xff]
    %v729 = vld [vmem:[#allocation10 + $0x590] sm:$0xff]
    %v730 = vld [vmem:[#allocation10 + $0x598] sm:$0xff]
    %v731 = vld [vmem:[#allocation10 + $0x5a0] sm:$0xff]
    %v732 = vld [vmem:[#allocation10 + $0x5a8] sm:$0xff]
    %v733 = vld [vmem:[#allocation10 + $0x5b0] sm:$0xff]
    %v734 = vld [vmem:[#allocation10 + $0x5b8] sm:$0xff]
    %v735 = vld [vmem:[#allocation10 + $0x5c0] sm:$0xff]
    %v736 = vld [vmem:[#allocation10 + $0x5c8] sm:$0xff]
    %v737 = vld [vmem:[#allocation10 + $0x5d0] sm:$0xff]
    %v738 = vld [vmem:[#allocation10 + $0x5d8] sm:$0xff]
    %v739 = vld [vmem:[#allocation10 + $0x5e0] sm:$0xff]
    %v740 = vld [vmem:[#allocation10 + $0x5e8] sm:$0xff]
    %v741 = vld [vmem:[#allocation10 + $0x5f0] sm:$0xff]
    %v742 = vld [vmem:[#allocation10 + $0x5f8] sm:$0xff]
    %v743 = vld [vmem:[#allocation10 + $0x600] sm:$0xff]
    %v744 = vld [vmem:[#allocation10 + $0x608] sm:$0xff]
    %v745 = vld [vmem:[#allocation10 + $0x610] sm:$0xff]
    %v746 = vld [vmem:[#allocation10 + $0x618] sm:$0xff]
    %v747 = vld [vmem:[#allocation10 + $0x620] sm:$0xff]
    %v748 = vld [vmem:[#allocation10 + $0x628] sm:$0xff]
    %v749 = vld [vmem:[#allocation10 + $0x630] sm:$0xff]
    %v750 = vld [vmem:[#allocation10 + $0x638] sm:$0xff]
    %v751 = vld [vmem:[#allocation10 + $0x640] sm:$0xff]
    %v752 = vld [vmem:[#allocation10 + $0x648] sm:$0xff]
    %v753 = vld [vmem:[#allocation10 + $0x650] sm:$0xff]
    %v754 = vld [vmem:[#allocation10 + $0x658] sm:$0xff]
    %v755 = vld [vmem:[#allocation10 + $0x660] sm:$0xff]
    %v756 = vld [vmem:[#allocation10 + $0x668] sm:$0xff]
    %v757 = vld [vmem:[#allocation10 + $0x670] sm:$0xff]
    %v758 = vld [vmem:[#allocation10 + $0x678] sm:$0xff]
    %v759 = vld [vmem:[#allocation10 + $0x680] sm:$0xff]
    %v760 = vld [vmem:[#allocation10 + $0x688] sm:$0xff]
    %v761 = vld [vmem:[#allocation10 + $0x690] sm:$0xff]
    %v762 = vld [vmem:[#allocation10 + $0x698] sm:$0xff]
    %v763 = vld [vmem:[#allocation10 + $0x6a0] sm:$0xff]
    %v764 = vld [vmem:[#allocation10 + $0x6a8] sm:$0xff]
    %v765 = vld [vmem:[#allocation10 + $0x6b0] sm:$0xff]
    %v766 = vld [vmem:[#allocation10 + $0x6b8] sm:$0xff]
    %v767 = vld [vmem:[#allocation10 + $0x6c0] sm:$0xff]
    %v768 = vld [vmem:[#allocation10 + $0x6c8] sm:$0xff]
    %v769 = vld [vmem:[#allocation10 + $0x6d0] sm:$0xff]
    %v770 = vld [vmem:[#allocation10 + $0x6d8] sm:$0xff]
    %v771 = vld [vmem:[#allocation10 + $0x6e0] sm:$0xff]
    %v772 = vld [vmem:[#allocation10 + $0x6e8] sm:$0xff]
    %v773 = vld [vmem:[#allocation10 + $0x6f0] sm:$0xff]
    %v774 = vld [vmem:[#allocation10 + $0x6f8] sm:$0xff]
    %v775 = vld [vmem:[#allocation10 + $0x700] sm:$0xff]
    %v776 = vld [vmem:[#allocation10 + $0x708] sm:$0xff]
    %v777 = vld [vmem:[#allocation10 + $0x710] sm:$0xff]
    %v778 = vld [vmem:[#allocation10 + $0x718] sm:$0xff]
    %v779 = vld [vmem:[#allocation10 + $0x720] sm:$0xff]
    %v780 = vld [vmem:[#allocation10 + $0x728] sm:$0xff]
    %v781 = vld [vmem:[#allocation10 + $0x730] sm:$0xff]
    %v782 = vld [vmem:[#allocation10 + $0x738] sm:$0xff]
    %v783 = vld [vmem:[#allocation10 + $0x740] sm:$0xff]
    %v784 = vld [vmem:[#allocation10 + $0x748] sm:$0xff]
    %v785 = vld [vmem:[#allocation10 + $0x750] sm:$0xff]
    %v786 = vld [vmem:[#allocation10 + $0x758] sm:$0xff]
    %v787 = vld [vmem:[#allocation10 + $0x760] sm:$0xff]
    %v788 = vld [vmem:[#allocation10 + $0x768] sm:$0xff]
    %v789 = vld [vmem:[#allocation10 + $0x770] sm:$0xff]
    %v790 = vld [vmem:[#allocation10 + $0x778] sm:$0xff]
    %v791 = vld [vmem:[#allocation10 + $0x780] sm:$0xff]
    %v792 = vld [vmem:[#allocation10 + $0x788] sm:$0xff]
    %v793 = vld [vmem:[#allocation10 + $0x790] sm:$0xff]
    %v794 = vld [vmem:[#allocation10 + $0x798] sm:$0xff]
    %v795 = vld [vmem:[#allocation10 + $0x7a0] sm:$0xff]
    %v796 = vld [vmem:[#allocation10 + $0x7a8] sm:$0xff]
    %v797 = vld [vmem:[#allocation10 + $0x7b0] sm:$0xff]
    %v798 = vld [vmem:[#allocation10 + $0x7b8] sm:$0xff]
    %v799 = vld [vmem:[#allocation10 + $0x7c0] sm:$0xff]
    %v800 = vld [vmem:[#allocation10 + $0x7c8] sm:$0xff]
    %v801 = vld [vmem:[#allocation10 + $0x7d0] sm:$0xff]
    %v802 = vld [vmem:[#allocation10 + $0x7d8] sm:$0xff]
    %v803 = vld [vmem:[#allocation10 + $0x7e0] sm:$0xff]
    %v804 = vld [vmem:[#allocation10 + $0x7e8] sm:$0xff]
    %v805 = vld [vmem:[#allocation10 + $0x7f0] sm:$0xff]
    %v806 = vld [vmem:[#allocation10 + $0x7f8] sm:$0xff]
    %v807 = vld [vmem:[%s5] sm:$0xf]
    %v809 = vperm.slane %v807, 0
    %v810 = vperm.slane %v807, 1
    %v811 = vperm.slane %v807, 2
    %v812 = vperm.slane %v807, 3
    %817 = vmatpush.msra.mxu0 %v611
    %818 = vmatpush.msra.mxu0 %v607
    %819 = vmatpush.msra.mxu0 %v603
    %820 = vmatpush.msra.mxu0 %v599
    %821 = vmatpush.msra.mxu0 %v595
    %822 = vmatpush.msra.mxu0 %v591
    %823 = vmatpush.msra.mxu0 %v587
    %824 = vmatpush.msra.mxu0 %v583
    %825 = vmatpush.msra.mxu0 %v579
    %826 = vmatpush.msra.mxu0 %v575
    %827 = vmatpush.msra.mxu0 %v571
    %828 = vmatpush.msra.mxu0 %v567
    %829 = vmatpush.msra.mxu0 %v563
    %830 = vmatpush.msra.mxu0 %v559
    %831 = vmatpush.msra.mxu0 %v555
    %832 = vmatpush.msra.mxu0 %v551
    %833 = vmatmul.f32.gmra.mxu0 %v547
    %v834 = vpop.f32.mrf.mxu0
    %v835 = vadd.f32 %v809, %v834
    %836 = vdwg.mxu0
    %837 = vmatpush.msra.mxu0 %v675
    %838 = vmatpush.msra.mxu0 %v671
    %839 = vmatpush.msra.mxu0 %v667
    %840 = vmatpush.msra.mxu0 %v663
    %841 = vmatpush.msra.mxu0 %v659
    %842 = vmatpush.msra.mxu0 %v655
    %843 = vmatpush.msra.mxu0 %v651
    %844 = vmatpush.msra.mxu0 %v647
    %845 = vmatpush.msra.mxu0 %v643
    %846 = vmatpush.msra.mxu0 %v639
    %847 = vmatpush.msra.mxu0 %v635
    %848 = vmatpush.msra.mxu0 %v631
    %849 = vmatpush.msra.mxu0 %v627
    %850 = vmatpush.msra.mxu0 %v623
    %851 = vmatpush.msra.mxu0 %v619
    %852 = vmatpush.msra.mxu0 %v615
    %853 = vmatmul.f32.gmra.mxu0 %v548
    %v854 = vpop.f32.mrf.mxu0
    %v855 = vadd.f32 %v835, %v854
    %856 = vdwg.mxu0
    %857 = vmatpush.msra.mxu0 %v739
    %858 = vmatpush.msra.mxu0 %v735
    %859 = vmatpush.msra.mxu0 %v731
    %860 = vmatpush.msra.mxu0 %v727
    %861 = vmatpush.msra.mxu0 %v723
    %862 = vmatpush.msra.mxu0 %v719
    %863 = vmatpush.msra.mxu0 %v715
    %864 = vmatpush.msra.mxu0 %v711
    %865 = vmatpush.msra.mxu0 %v707
    %866 = vmatpush.msra.mxu0 %v703
    %867 = vmatpush.msra.mxu0 %v699
    %868 = vmatpush.msra.mxu0 %v695
    %869 = vmatpush.msra.mxu0 %v691
    %870 = vmatpush.msra.mxu0 %v687
    %871 = vmatpush.msra.mxu0 %v683
    %872 = vmatpush.msra.mxu0 %v679
    %873 = vmatmul.f32.gmra.mxu0 %v549
    %v874 = vpop.f32.mrf.mxu0
    %v875 = vadd.f32 %v855, %v874
    %876 = vdwg.mxu0
    %877 = vmatpush.msra.mxu0 %v803
    %878 = vmatpush.msra.mxu0 %v799
    %879 = vmatpush.msra.mxu0 %v795
    %880 = vmatpush.msra.mxu0 %v791
    %881 = vmatpush.msra.mxu0 %v787
    %882 = vmatpush.msra.mxu0 %v783
    %883 = vmatpush.msra.mxu0 %v779
    %884 = vmatpush.msra.mxu0 %v775
    %885 = vmatpush.msra.mxu0 %v771
    %886 = vmatpush.msra.mxu0 %v767
    %887 = vmatpush.msra.mxu0 %v763
    %888 = vmatpush.msra.mxu0 %v759
    %889 = vmatpush.msra.mxu0 %v755
    %890 = vmatpush.msra.mxu0 %v751
    %891 = vmatpush.msra.mxu0 %v747
    %892 = vmatpush.msra.mxu0 %v743
    %893 = vmatmul.f32.gmra.mxu0 %v550
    %v894 = vpop.f32.mrf.mxu0
    %v895 = vadd.f32 %v875, %v894
    %896 = vdwg.mxu0
    %897 = vmatpush.msra.mxu0 %v612
    %898 = vmatpush.msra.mxu0 %v608
    %899 = vmatpush.msra.mxu0 %v604
    %900 = vmatpush.msra.mxu0 %v600
    %901 = vmatpush.msra.mxu0 %v596
    %902 = vmatpush.msra.mxu0 %v592
    %903 = vmatpush.msra.mxu0 %v588
    %904 = vmatpush.msra.mxu0 %v584
    %905 = vmatpush.msra.mxu0 %v580
    %906 = vmatpush.msra.mxu0 %v576
    %907 = vmatpush.msra.mxu0 %v572
    %908 = vmatpush.msra.mxu0 %v568
    %909 = vmatpush.msra.mxu0 %v564
    %910 = vmatpush.msra.mxu0 %v560
    %911 = vmatpush.msra.mxu0 %v556
    %912 = vmatpush.msra.mxu0 %v552
    %913 = vmatmul.f32.gmra.mxu0 %v547
    %v914 = vpop.f32.mrf.mxu0
    %v915 = vadd.f32 %v810, %v914
    %916 = vdwg.mxu0
    %917 = vmatpush.msra.mxu0 %v676
    %918 = vmatpush.msra.mxu0 %v672
    %919 = vmatpush.msra.mxu0 %v668
    %920 = vmatpush.msra.mxu0 %v664
    %921 = vmatpush.msra.mxu0 %v660
    %922 = vmatpush.msra.mxu0 %v656
    %923 = vmatpush.msra.mxu0 %v652
    %924 = vmatpush.msra.mxu0 %v648
    %925 = vmatpush.msra.mxu0 %v644
    %926 = vmatpush.msra.mxu0 %v640
    %927 = vmatpush.msra.mxu0 %v636
    %928 = vmatpush.msra.mxu0 %v632
    %929 = vmatpush.msra.mxu0 %v628
    %930 = vmatpush.msra.mxu0 %v624
    %931 = vmatpush.msra.mxu0 %v620
    %932 = vmatpush.msra.mxu0 %v616
    %933 = vmatmul.f32.gmra.mxu0 %v548
    %v934 = vpop.f32.mrf.mxu0
    %v935 = vadd.f32 %v915, %v934
    %936 = vdwg.mxu0
    %937 = vmatpush.msra.mxu0 %v740
    %938 = vmatpush.msra.mxu0 %v736
    %939 = vmatpush.msra.mxu0 %v732
    %940 = vmatpush.msra.mxu0 %v728
    %941 = vmatpush.msra.mxu0 %v724
    %942 = vmatpush.msra.mxu0 %v720
    %943 = vmatpush.msra.mxu0 %v716
    %944 = vmatpush.msra.mxu0 %v712
    %945 = vmatpush.msra.mxu0 %v708
    %946 = vmatpush.msra.mxu0 %v704
    %947 = vmatpush.msra.mxu0 %v700
    %948 = vmatpush.msra.mxu0 %v696
    %949 = vmatpush.msra.mxu0 %v692
    %950 = vmatpush.msra.mxu0 %v688
    %951 = vmatpush.msra.mxu0 %v684
    %952 = vmatpush.msra.mxu0 %v680
    %953 = vmatmul.f32.gmra.mxu0 %v549
    %v954 = vpop.f32.mrf.mxu0
    %v955 = vadd.f32 %v935, %v954
    %956 = vdwg.mxu0
    %957 = vmatpush.msra.mxu0 %v804
    %958 = vmatpush.msra.mxu0 %v800
    %959 = vmatpush.msra.mxu0 %v796
    %960 = vmatpush.msra.mxu0 %v792
    %961 = vmatpush.msra.mxu0 %v788
    %962 = vmatpush.msra.mxu0 %v784
    %963 = vmatpush.msra.mxu0 %v780
    %964 = vmatpush.msra.mxu0 %v776
    %965 = vmatpush.msra.mxu0 %v772
    %966 = vmatpush.msra.mxu0 %v768
    %967 = vmatpush.msra.mxu0 %v764
    %968 = vmatpush.msra.mxu0 %v760
    %969 = vmatpush.msra.mxu0 %v756
    %970 = vmatpush.msra.mxu0 %v752
    %971 = vmatpush.msra.mxu0 %v748
    %972 = vmatpush.msra.mxu0 %v744
    %973 = vmatmul.f32.gmra.mxu0 %v550
    %v974 = vpop.f32.mrf.mxu0
    %v975 = vadd.f32 %v955, %v974
    %976 = vdwg.mxu0
    %977 = vmatpush.msra.mxu0 %v613
    %978 = vmatpush.msra.mxu0 %v609
    %979 = vmatpush.msra.mxu0 %v605
    %980 = vmatpush.msra.mxu0 %v601
    %981 = vmatpush.msra.mxu0 %v597
    %982 = vmatpush.msra.mxu0 %v593
    %983 = vmatpush.msra.mxu0 %v589
    %984 = vmatpush.msra.mxu0 %v585
    %985 = vmatpush.msra.mxu0 %v581
    %986 = vmatpush.msra.mxu0 %v577
    %987 = vmatpush.msra.mxu0 %v573
    %988 = vmatpush.msra.mxu0 %v569
    %989 = vmatpush.msra.mxu0 %v565
    %990 = vmatpush.msra.mxu0 %v561
    %991 = vmatpush.msra.mxu0 %v557
    %992 = vmatpush.msra.mxu0 %v553
    %993 = vmatmul.f32.gmra.mxu0 %v547
    %v994 = vpop.f32.mrf.mxu0
    %v995 = vadd.f32 %v811, %v994
    %996 = vdwg.mxu0
    %997 = vmatpush.msra.mxu0 %v677
    %998 = vmatpush.msra.mxu0 %v673
    %999 = vmatpush.msra.mxu0 %v669
    %1000 = vmatpush.msra.mxu0 %v665
    %1001 = vmatpush.msra.mxu0 %v661
    %1002 = vmatpush.msra.mxu0 %v657
    %1003 = vmatpush.msra.mxu0 %v653
    %1004 = vmatpush.msra.mxu0 %v649
    %1005 = vmatpush.msra.mxu0 %v645
    %1006 = vmatpush.msra.mxu0 %v641
    %1007 = vmatpush.msra.mxu0 %v637
    %1008 = vmatpush.msra.mxu0 %v633
    %1009 = vmatpush.msra.mxu0 %v629
    %1010 = vmatpush.msra.mxu0 %v625
    %1011 = vmatpush.msra.mxu0 %v621
    %1012 = vmatpush.msra.mxu0 %v617
    %1013 = vmatmul.f32.gmra.mxu0 %v548
    %v1014 = vpop.f32.mrf.mxu0
    %v1015 = vadd.f32 %v995, %v1014
    %1016 = vdwg.mxu0
    %1017 = vmatpush.msra.mxu0 %v741
    %1018 = vmatpush.msra.mxu0 %v737
    %1019 = vmatpush.msra.mxu0 %v733
    %1020 = vmatpush.msra.mxu0 %v729
    %1021 = vmatpush.msra.mxu0 %v725
    %1022 = vmatpush.msra.mxu0 %v721
    %1023 = vmatpush.msra.mxu0 %v717
    %1024 = vmatpush.msra.mxu0 %v713
    %1025 = vmatpush.msra.mxu0 %v709
    %1026 = vmatpush.msra.mxu0 %v705
    %1027 = vmatpush.msra.mxu0 %v701
    %1028 = vmatpush.msra.mxu0 %v697
    %1029 = vmatpush.msra.mxu0 %v693
    %1030 = vmatpush.msra.mxu0 %v689
    %1031 = vmatpush.msra.mxu0 %v685
    %1032 = vmatpush.msra.mxu0 %v681
    %1033 = vmatmul.f32.gmra.mxu0 %v549
    %v1034 = vpop.f32.mrf.mxu0
    %v1035 = vadd.f32 %v1015, %v1034
    %1036 = vdwg.mxu0
    %1037 = vmatpush.msra.mxu0 %v805
    %1038 = vmatpush.msra.mxu0 %v801
    %1039 = vmatpush.msra.mxu0 %v797
    %1040 = vmatpush.msra.mxu0 %v793
    %1041 = vmatpush.msra.mxu0 %v789
    %1042 = vmatpush.msra.mxu0 %v785
    %1043 = vmatpush.msra.mxu0 %v781
    %1044 = vmatpush.msra.mxu0 %v777
    %1045 = vmatpush.msra.mxu0 %v773
    %1046 = vmatpush.msra.mxu0 %v769
    %1047 = vmatpush.msra.mxu0 %v765
    %1048 = vmatpush.msra.mxu0 %v761
    %1049 = vmatpush.msra.mxu0 %v757
    %1050 = vmatpush.msra.mxu0 %v753
    %1051 = vmatpush.msra.mxu0 %v749
    %1052 = vmatpush.msra.mxu0 %v745
    %1053 = vmatmul.f32.gmra.mxu0 %v550
    %v1054 = vpop.f32.mrf.mxu0
    %v1055 = vadd.f32 %v1035, %v1054
    %1056 = vdwg.mxu0
    %1057 = vmatpush.msra.mxu0 %v614
    %1058 = vmatpush.msra.mxu0 %v610
    %1059 = vmatpush.msra.mxu0 %v606
    %1060 = vmatpush.msra.mxu0 %v602
    %1061 = vmatpush.msra.mxu0 %v598
    %1062 = vmatpush.msra.mxu0 %v594
    %1063 = vmatpush.msra.mxu0 %v590
    %1064 = vmatpush.msra.mxu0 %v586
    %1065 = vmatpush.msra.mxu0 %v582
    %1066 = vmatpush.msra.mxu0 %v578
    %1067 = vmatpush.msra.mxu0 %v574
    %1068 = vmatpush.msra.mxu0 %v570
    %1069 = vmatpush.msra.mxu0 %v566
    %1070 = vmatpush.msra.mxu0 %v562
    %1071 = vmatpush.msra.mxu0 %v558
    %1072 = vmatpush.msra.mxu0 %v554
    %1073 = vmatmul.f32.gmra.mxu0 %v547
    %v1074 = vpop.f32.mrf.mxu0
    %v1075 = vadd.f32 %v812, %v1074
    %1076 = vdwg.mxu0
    %1077 = vmatpush.msra.mxu0 %v678
    %1078 = vmatpush.msra.mxu0 %v674
    %1079 = vmatpush.msra.mxu0 %v670
    %1080 = vmatpush.msra.mxu0 %v666
    %1081 = vmatpush.msra.mxu0 %v662
    %1082 = vmatpush.msra.mxu0 %v658
    %1083 = vmatpush.msra.mxu0 %v654
    %1084 = vmatpush.msra.mxu0 %v650
    %1085 = vmatpush.msra.mxu0 %v646
    %1086 = vmatpush.msra.mxu0 %v642
    %1087 = vmatpush.msra.mxu0 %v638
    %1088 = vmatpush.msra.mxu0 %v634
    %1089 = vmatpush.msra.mxu0 %v630
    %1090 = vmatpush.msra.mxu0 %v626
    %1091 = vmatpush.msra.mxu0 %v622
    %1092 = vmatpush.msra.mxu0 %v618
    %1093 = vmatmul.f32.gmra.mxu0 %v548
    %v1094 = vpop.f32.mrf.mxu0
    %v1095 = vadd.f32 %v1075, %v1094
    %1096 = vdwg.mxu0
    %1097 = vmatpush.msra.mxu0 %v742
    %1098 = vmatpush.msra.mxu0 %v738
    %1099 = vmatpush.msra.mxu0 %v734
    %1100 = vmatpush.msra.mxu0 %v730
    %1101 = vmatpush.msra.mxu0 %v726
    %1102 = vmatpush.msra.mxu0 %v722
    %1103 = vmatpush.msra.mxu0 %v718
    %1104 = vmatpush.msra.mxu0 %v714
    %1105 = vmatpush.msra.mxu0 %v710
    %1106 = vmatpush.msra.mxu0 %v706
    %1107 = vmatpush.msra.mxu0 %v702
    %1108 = vmatpush.msra.mxu0 %v698
    %1109 = vmatpush.msra.mxu0 %v694
    %1110 = vmatpush.msra.mxu0 %v690
    %1111 = vmatpush.msra.mxu0 %v686
    %1112 = vmatpush.msra.mxu0 %v682
    %1113 = vmatmul.f32.gmra.mxu0 %v549
    %v1114 = vpop.f32.mrf.mxu0
    %v1115 = vadd.f32 %v1095, %v1114
    %1116 = vdwg.mxu0
    %1117 = vmatpush.msra.mxu0 %v806
    %1118 = vmatpush.msra.mxu0 %v802
    %1119 = vmatpush.msra.mxu0 %v798
    %1120 = vmatpush.msra.mxu0 %v794
    %1121 = vmatpush.msra.mxu0 %v790
    %1122 = vmatpush.msra.mxu0 %v786
    %1123 = vmatpush.msra.mxu0 %v782
    %1124 = vmatpush.msra.mxu0 %v778
    %1125 = vmatpush.msra.mxu0 %v774
    %1126 = vmatpush.msra.mxu0 %v770
    %1127 = vmatpush.msra.mxu0 %v766
    %1128 = vmatpush.msra.mxu0 %v762
    %1129 = vmatpush.msra.mxu0 %v758
    %1130 = vmatpush.msra.mxu0 %v754
    %1131 = vmatpush.msra.mxu0 %v750
    %1132 = vmatpush.msra.mxu0 %v746
    %1133 = vmatmul.f32.gmra.mxu0 %v550
    %v1134 = vpop.f32.mrf.mxu0
    %v1135 = vadd.f32 %v1115, %v1134
    %1136 = vdwg.mxu0
    %v1137 = vmax.f32 %v895, 0.0
    %v1138 = vmax.f32 %v975, 0.0
    %v1139 = vmax.f32 %v1055, 0.0
    %v1140 = vmax.f32 %v1135, 0.0
    %v1141 = vld [vmem:[#allocation2] sm:$0xff]
    %v1142 = vld [vmem:[#allocation2 + $0x8] sm:$0xff]
    %v1143 = vld [vmem:[#allocation2 + $0x10] sm:$0xff]
    %v1144 = vld [vmem:[#allocation2 + $0x18] sm:$0xff]
    %v1145 = vsub.f32 %v1141, %v1137
    %v1146 = vsub.f32 %v1142, %v1138
    %v1147 = vsub.f32 %v1143, %v1139
    %v1148 = vsub.f32 %v1144, %v1140
    %v1149 = vmul.f32 %v1145, %v1145
    %v1150 = vmul.f32 %v1146, %v1146
    %v1151 = vmul.f32 %v1147, %v1147
    %v1152 = vmul.f32 %v1148, %v1148
    %v1153 = vld [vmem:[#allocation11] sm:$0x1]
    %v1154 = vadd.f32 %v1149, %v1150
    %v1155 = vadd.f32 %v1154, %v1151
    %v1156 = vadd.f32 %v1155, %v1152
    %1157 = vadd.xlane.f32.xlu0 %v1156
    %v1158 = vpop.xlane.xlu0 %1157
    %v1159 = vrot.slane %v1158, 4
    %v1160 = vadd.f32 %v1158, %v1159
    %v1161 = vrot.slane %v1160, 2
    %v1162 = vadd.f32 %v1160, %v1161
    %v1163 = vrot.slane %v1162, 1
    %v1164 = vadd.f32 %v1162, %v1163
    %s1165 = vtos %v1164
    %v1166 = vstv %s1165
    %v1167 = vadd.f32 %v1153, %v1166
    %vm1168 = vcmask 0
    %1169 = vst.msk [vmem:[#allocation11] sm:$0x1] %vm1168, %v1167
    // Predicated region
    $region50: #{tpu_custom_call.1} parent=1 // pred_check
      _
    $region51: #{tpu_custom_call.1} parent=1 // pred_check_branch
      %1171 = sbr.rel (0) target = $region53
    $region52: #{tpu_custom_call.1} parent=1 // pred_region
      %1173 = vsyncadd [#allocation4], 0
      %s1175 = sshll.u32 [#allocation11], 4
      %s1176 = int_to_ptr.vmem [resolvable:$true] %s1175
      %s1177 = sshll.u32 %s6, 4
      %s1178 = int_to_ptr.hbm [resolvable:$true] %s1177
      %1180 = dma.vmem_to_hbm [thread:$0]  %s1176, 16, %s1178, [#allocation4]
    $region53: #{tpu_custom_call.1} parent=1 // pred_fallthru
      _
    // Predicated region
    $region54: #{tpu_custom_call.1} parent=1 // pred_check
      _
    $region55: #{tpu_custom_call.1} parent=1 // pred_check_branch
      %1182 = sbr.rel (0) target = $region57
    $region56: #{tpu_custom_call.1} parent=1 // pred_region
      %1184 = dma.done [#allocation4], 16
    $region57: #{tpu_custom_call.1} parent=1 // pred_fallthru
      _
    %1185 = vsyncpa [#allocation3], 1
    %1186 = vsyncpa [#allocation6], 1
    %1187 = vsyncpa [#allocation9], 1
    %1188 = vsyncpa [#allocation4], 1

</llo_original>
